<compile_context>
chip_gen: v7x
topology: tpu7x:2x2x1
jax: 0.10.0
libtpu: 0.0.40
codegen_flags: <defaults>
</compile_context>

<pallas_src>
import math

import jax
import jax.numpy as jnp
from jax.experimental import pallas as pl
from jax.experimental.pallas import tpu as pltpu

# ----------------------------- config ---------------------------------------
VOCAB = 100
MAX_POS = 16
TYPE_VOCAB = 2
HIDDEN = 32
NUM_HEADS = 2
HEAD_DIM = HIDDEN // NUM_HEADS
INTERMEDIATE = 4 * HIDDEN
NUM_LAYERS = 2
NUM_LABELS = 1            # risk_head = nn.Linear(hidden_size, 1)
LN_EPS = 1e-12
LANE = 128                # lane-dense padded classifier output width


# ----------------------------- fused kernel ---------------------------------
def _make_kernel(B, S):
    T = B * S

    def kernel(ids_ref, mask_ref, wemb_ref, postype_ref, ln_ref,
               wqkv_ref, bqkv_ref, wo_ref, bo_ref,
               wi_ref, bi_ref, wo2_ref, bo2_ref,
               wp_ref, bp_ref, wc_ref, bc_ref,
               o_ref):
        """Whole RiskBert forward for all B*S tokens in one shot."""

        def layernorm(x, g, b):
            mu = jnp.mean(x, axis=-1, keepdims=True)
            var = jnp.mean((x - mu) ** 2, axis=-1, keepdims=True)
            return (x - mu) * jax.lax.rsqrt(var + LN_EPS) * g + b

        ln = ln_ref[...]                       # (2 + 4L, H) packed LN params
        mask = mask_ref[...]                   # (T, T) hoisted once: 0 / -10000
        inv_sqrt_dh = 1.0 / math.sqrt(HEAD_DIM)
        gelu_c = math.sqrt(2.0 / math.pi)

        # ---- embeddings fused in-kernel: one-hot gather as an MXU matmul ----
        ids = ids_ref[...]                                          # (T, 1) int32
        vocab_iota = jax.lax.broadcasted_iota(jnp.int32, (T, VOCAB), 1)
        onehot = (vocab_iota == ids).astype(jnp.float32)            # (T, VOCAB)
        x = (jnp.dot(onehot, wemb_ref[...],
                     preferred_element_type=jnp.float32)
             + postype_ref[...])                                    # (T, H)
        x = layernorm(x, ln[0:1, :], ln[1:2, :])

        for l in range(NUM_LAYERS):            # static unroll (2 layers)
            # ---- self-attention: fused QKV projection (one matmul, M=T) ----
            qkv = (jnp.dot(x, wqkv_ref[l],
                           preferred_element_type=jnp.float32)
                   + bqkv_ref[l])                                   # (T, 3H)
            wo_l = wo_ref[l]                                        # (H, H)

            attn = None
            for h in range(NUM_HEADS):         # static unroll (2 heads)
                lo = h * HEAD_DIM
                qh = qkv[:, lo:lo + HEAD_DIM]
                kh = qkv[:, HIDDEN + lo:HIDDEN + lo + HEAD_DIM]
                vh = qkv[:, 2 * HIDDEN + lo:2 * HIDDEN + lo + HEAD_DIM]
                scores = jax.lax.dot_general(
                    qh, kh, (((1,), (1,)), ((), ())),
                    preferred_element_type=jnp.float32) * inv_sqrt_dh
                scores = scores + mask                              # (T, T)
                scores = scores - jnp.max(scores, axis=-1, keepdims=True)
                p = jnp.exp(scores)
                p = p * pl.reciprocal(jnp.sum(p, axis=-1, keepdims=True),
                                      approx=True)
                ctx_h = jnp.dot(p, vh,
                                preferred_element_type=jnp.float32)  # (T, D)
                # accumulate straight into the output projection (no concat)
                part = jnp.dot(ctx_h, wo_l[lo:lo + HEAD_DIM, :],
                               preferred_element_type=jnp.float32)   # (T, H)
                attn = part if attn is None else attn + part
            attn = attn + bo_ref[l]

            base = 2 + 4 * l
            x = layernorm(attn + x, ln[base:base + 1, :], ln[base + 1:base + 2, :])

            # ---- feed-forward ----
            inter = (jnp.dot(x, wi_ref[l],
                             preferred_element_type=jnp.float32)
                     + bi_ref[l])                                   # (T, I)
            # TODO(synk): tanh-approx GELU; HF bert-base uses exact erf GELU.
            inter = 0.5 * inter * (1.0 + jnp.tanh(
                gelu_c * (inter + 0.044715 * inter * inter * inter)))
            ffn = (jnp.dot(inter, wo2_ref[l],
                           preferred_element_type=jnp.float32)
                   + bo2_ref[l])
            x = layernorm(ffn + x, ln[base + 2:base + 3, :], ln[base + 3:base + 4, :])

        # ---- pooler (all B [CLS] rows at once) + dropout(eval)=identity
        #      + risk head + sigmoid, batched across B ----
        # One-hot CLS row selector built from iotas -> tiny MXU matmul instead
        # of a strided sublane gather.
        row_sel = (jax.lax.broadcasted_iota(jnp.int32, (B, T), 0) * S
                   == jax.lax.broadcasted_iota(jnp.int32, (B, T), 1)
                   ).astype(jnp.float32)                            # (B, T)
        cls = jnp.dot(row_sel, x, preferred_element_type=jnp.float32)  # (B, H)
        pooled = jnp.tanh(
            jnp.dot(cls, wp_ref[...], preferred_element_type=jnp.float32)
            + bp_ref[...])
        logits = (jnp.dot(pooled, wc_ref[...],
                          preferred_element_type=jnp.float32)
                  + bc_ref[...])                                    # (B, 128)
        o_ref[...] = 1.0 / (1.0 + jnp.exp(-logits))

    return kernel


# ----------------------------- wrapper ---------------------------------------
def riskbert_forward(params, input_ids, attention_mask):
    B, S = input_ids.shape
    T = B * S

    ids = input_ids.reshape(T, 1).astype(jnp.int32)

    # Block-diagonal (per-batch isolation) + key-padding additive mask, built
    # once as tiny glue: 0 where (same batch AND key kept), else -10000.
    tok_batch = jnp.arange(T, dtype=jnp.int32) // S
    same_batch = tok_batch[:, None] == tok_batch[None, :]
    key_keep = attention_mask.reshape(T) > 0
    mask = jnp.where(same_batch & key_keep[None, :], 0.0, -10000.0
                     ).astype(jnp.float32)                          # (T, T)

    # Position + token-type(=0) embedding slab, tiled across the batch.
    # (Input-independent; token_type_ids default to 0 matching the PyTorch call.)
    pos_type = params["pos_emb"][:S] + params["type_emb"][0][None, :]
    pos_type = jnp.tile(pos_type, (B, 1)).astype(jnp.float32)       # (T, H)

    vmem = pl.BlockSpec(memory_space=pltpu.MemorySpace.VMEM)

    out_pad = pl.pallas_call(
        _make_kernel(B, S),
        in_specs=[vmem] * 17,
        out_specs=vmem,
        out_shape=jax.ShapeDtypeStruct((B, LANE), jnp.float32),
    )(ids, mask, params["word_emb"], pos_type, params["ln_all"],
      params["wqkv"], params["bqkv"], params["wo"], params["bo"],
      params["wi"], params["bi"], params["wo2"], params["bo2"],
      params["wp"], params["bp"], params["wc_pad"], params["bc_pad"])

    return out_pad[:, :NUM_LABELS]                                  # (B, 1)


# ----------------------------- parameters -----------------------------------
def init_params(key):
    std = 0.02

    def nrm(k, shape):
        return std * jax.random.normal(k, shape, dtype=jnp.float32)

    ks = jax.random.split(key, 9)

    # Packed LayerNorm params: row 0/1 = embedding gamma/beta; per layer l the
    # rows [2+4l .. 2+4l+3] are (attn_gamma, attn_beta, ffn_gamma, ffn_beta).
    n_ln = 2 + 4 * NUM_LAYERS
    gamma_rows = jnp.array(
        [0] + [2 + 4 * l for l in range(NUM_LAYERS)]
            + [4 + 4 * l for l in range(NUM_LAYERS)], dtype=jnp.int32)
    ln_all = jnp.zeros((n_ln, HIDDEN), jnp.float32).at[gamma_rows].set(1.0)

    # Risk head padded to a lane-dense 128-wide slab (extra columns are zero).
    wc = nrm(ks[8], (HIDDEN, NUM_LABELS))
    wc_pad = jnp.zeros((HIDDEN, LANE), jnp.float32).at[:, :NUM_LABELS].set(wc)
    bc_pad = jnp.zeros((1, LANE), jnp.float32)

    return {
        "word_emb": nrm(ks[0], (VOCAB, HIDDEN)),
        "pos_emb": nrm(ks[1], (MAX_POS, HIDDEN)),
        "type_emb": nrm(ks[2], (TYPE_VOCAB, HIDDEN)),
        "ln_all": ln_all,
        # fused QKV per layer: one (H, 3H) weight instead of 3 separate ones
        "wqkv": nrm(ks[3], (NUM_LAYERS, HIDDEN, 3 * HIDDEN)),
        "bqkv": jnp.zeros((NUM_LAYERS, 1, 3 * HIDDEN), jnp.float32),
        "wo": nrm(ks[4], (NUM_LAYERS, HIDDEN, HIDDEN)),
        "bo": jnp.zeros((NUM_LAYERS, 1, HIDDEN), jnp.float32),
        "wi": nrm(ks[5], (NUM_LAYERS, HIDDEN, INTERMEDIATE)),
        "bi": jnp.zeros((NUM_LAYERS, 1, INTERMEDIATE), jnp.float32),
        "wo2": nrm(ks[6], (NUM_LAYERS, INTERMEDIATE, HIDDEN)),
        "bo2": jnp.zeros((NUM_LAYERS, 1, HIDDEN), jnp.float32),
        "wp": nrm(ks[7], (HIDDEN, HIDDEN)),
        "bp": jnp.zeros((1, HIDDEN), jnp.float32),
        "wc_pad": wc_pad,
        "bc_pad": bc_pad,
    }


# ----------------------------- main ------------------------------------------
if __name__ == "__main__":
    key = jax.random.PRNGKey(0)
    k_ids, k_params = jax.random.split(key)

    B, S = 2, 8
    input_ids = jax.random.randint(k_ids, (B, S), 0, VOCAB, dtype=jnp.int32)
    attention_mask = jnp.array(
        [[1, 1, 1, 1, 1, 1, 1, 1],
         [1, 1, 1, 1, 1, 0, 0, 0]], dtype=jnp.int32)

    params = init_params(k_params)

    forward = jax.jit(riskbert_forward)
    probs = forward(params, input_ids, attention_mask)
    probs = jax.block_until_ready(probs)

    assert probs.shape == (B, NUM_LABELS)
    assert bool(jnp.all((probs >= 0.0) & (probs <= 1.0)))
    assert bool(jnp.all(jnp.isfinite(probs)))
    print("KERNEL_OK")
</pallas_src>

<mosaic_0001>
module attributes {stable_mosaic.version = 11 : i64} {
  func.func @kernel(%arg0: memref<16x1xi32, #tpu.memory_space<vmem>>, %arg1: memref<16x16xf32, #tpu.memory_space<vmem>>, %arg2: memref<100x32xf32, #tpu.memory_space<vmem>>, %arg3: memref<16x32xf32, #tpu.memory_space<vmem>>, %arg4: memref<10x32xf32, #tpu.memory_space<vmem>>, %arg5: memref<2x32x96xf32, #tpu.memory_space<vmem>>, %arg6: memref<2x1x96xf32, #tpu.memory_space<vmem>>, %arg7: memref<2x32x32xf32, #tpu.memory_space<vmem>>, %arg8: memref<2x1x32xf32, #tpu.memory_space<vmem>>, %arg9: memref<2x32x128xf32, #tpu.memory_space<vmem>>, %arg10: memref<2x1x128xf32, #tpu.memory_space<vmem>>, %arg11: memref<2x128x32xf32, #tpu.memory_space<vmem>>, %arg12: memref<2x1x32xf32, #tpu.memory_space<vmem>>, %arg13: memref<32x32xf32, #tpu.memory_space<vmem>>, %arg14: memref<1x32xf32, #tpu.memory_space<vmem>>, %arg15: memref<32x128xf32, #tpu.memory_space<vmem>>, %arg16: memref<1x128xf32, #tpu.memory_space<vmem>>, %arg17: memref<2x128xf32, #tpu.memory_space<vmem>>) attributes {dimension_semantics = [], scalar_prefetch = 0 : i64, scratch_operands = 0 : i64, tpu.core_type = #tpu.core_type<tc>} {
    %c0 = arith.constant 0 : index
    %c0_0 = arith.constant 0 : index
    %0 = vector.load %arg4[%c0, %c0_0] : memref<10x32xf32, #tpu.memory_space<vmem>>, vector<10x32xf32>
    %c0_1 = arith.constant 0 : index
    %c0_2 = arith.constant 0 : index
    %1 = vector.load %arg1[%c0_1, %c0_2] : memref<16x16xf32, #tpu.memory_space<vmem>>, vector<16x16xf32>
    %c0_3 = arith.constant 0 : index
    %c0_4 = arith.constant 0 : index
    %2 = vector.load %arg0[%c0_3, %c0_4] : memref<16x1xi32, #tpu.memory_space<vmem>>, vector<16x1xi32>
    %3 = tpu.iota {dimensions = array<i32: 1>} : vector<16x100xi32>
    %4 = vector.broadcast %2 : vector<16x1xi32> to vector<16x100xi32>
    %5 = arith.cmpi eq, %3, %4 : vector<16x100xi32>
    %6 = arith.extui %5 : vector<16x100xi1> to vector<16x100xi32>
    %7 = arith.sitofp %6 : vector<16x100xi32> to vector<16x100xf32>
    %c0_5 = arith.constant 0 : index
    %c0_6 = arith.constant 0 : index
    %8 = vector.load %arg2[%c0_5, %c0_6] : memref<100x32xf32, #tpu.memory_space<vmem>>, vector<100x32xf32>
    %cst = arith.constant dense<0.000000e+00> : vector<16x32xf32>
    %9 = tpu.matmul %7, %8, %cst {dimension_numbers = #tpu.dot_dimension_numbers<[1], [0], [0], [1], [0, 0, 1, 1], [], []>} : vector<16x100xf32>, vector<100x32xf32>, vector<16x32xf32> -> vector<16x32xf32>
    %c0_7 = arith.constant 0 : index
    %c0_8 = arith.constant 0 : index
    %10 = vector.load %arg3[%c0_7, %c0_8] : memref<16x32xf32, #tpu.memory_space<vmem>>, vector<16x32xf32>
    %11 = arith.addf %9, %10 : vector<16x32xf32>
    %12 = vector.extract_strided_slice %0 {offsets = [0, 0], sizes = [1, 32], strides = [1, 1]} : vector<10x32xf32> to vector<1x32xf32>
    %13 = vector.extract_strided_slice %0 {offsets = [1, 0], sizes = [1, 32], strides = [1, 1]} : vector<10x32xf32> to vector<1x32xf32>
    %cst_9 = arith.constant dense<0.000000e+00> : vector<16xf32>
    %14 = vector.multi_reduction <add>, %11, %cst_9 [1] : vector<16x32xf32> to vector<16xf32>
    %15 = vector.shape_cast %14 : vector<16xf32> to vector<16x1xf32>
    %cst_10 = arith.constant 3.200000e+01 : f32
    %16 = vector.broadcast %cst_10 : f32 to vector<16x1xf32>
    %17 = arith.divf %15, %16 : vector<16x1xf32>
    %18 = vector.broadcast %17 : vector<16x1xf32> to vector<16x32xf32>
    %19 = arith.subf %11, %18 : vector<16x32xf32>
    %20 = arith.mulf %19, %19 : vector<16x32xf32>
    %cst_11 = arith.constant dense<0.000000e+00> : vector<16xf32>
    %21 = vector.multi_reduction <add>, %20, %cst_11 [1] : vector<16x32xf32> to vector<16xf32>
    %22 = vector.shape_cast %21 : vector<16xf32> to vector<16x1xf32>
    %cst_12 = arith.constant 3.200000e+01 : f32
    %23 = vector.broadcast %cst_12 : f32 to vector<16x1xf32>
    %24 = arith.divf %22, %23 : vector<16x1xf32>
    %25 = vector.broadcast %17 : vector<16x1xf32> to vector<16x32xf32>
    %26 = arith.subf %11, %25 : vector<16x32xf32>
    %cst_13 = arith.constant 9.99999996E-13 : f32
    %27 = vector.broadcast %cst_13 : f32 to vector<16x1xf32>
    %28 = arith.addf %24, %27 : vector<16x1xf32>
    %29 = math.rsqrt %28 : vector<16x1xf32>
    %30 = vector.broadcast %29 : vector<16x1xf32> to vector<16x32xf32>
    %31 = arith.mulf %26, %30 : vector<16x32xf32>
    %32 = vector.broadcast %12 : vector<1x32xf32> to vector<16x32xf32>
    %33 = arith.mulf %31, %32 : vector<16x32xf32>
    %34 = vector.broadcast %13 : vector<1x32xf32> to vector<16x32xf32>
    %35 = arith.addf %33, %34 : vector<16x32xf32>
    %c0_14 = arith.constant 0 : index
    %c0_15 = arith.constant 0 : index
    %c0_16 = arith.constant 0 : index
    %36 = vector.load %arg5[%c0_14, %c0_15, %c0_16] : memref<2x32x96xf32, #tpu.memory_space<vmem>>, vector<1x32x96xf32>
    %37 = vector.shape_cast %36 : vector<1x32x96xf32> to vector<32x96xf32>
    %cst_17 = arith.constant dense<0.000000e+00> : vector<16x96xf32>
    %38 = tpu.matmul %35, %37, %cst_17 {dimension_numbers = #tpu.dot_dimension_numbers<[1], [0], [0], [1], [0, 0, 1, 1], [], []>} : vector<16x32xf32>, vector<32x96xf32>, vector<16x96xf32> -> vector<16x96xf32>
    %c0_18 = arith.constant 0 : index
    %c0_19 = arith.constant 0 : index
    %c0_20 = arith.constant 0 : index
    %39 = vector.load %arg6[%c0_18, %c0_19, %c0_20] : memref<2x1x96xf32, #tpu.memory_space<vmem>>, vector<1x1x96xf32>
    %40 = vector.shape_cast %39 : vector<1x1x96xf32> to vector<1x96xf32>
    %41 = vector.broadcast %40 : vector<1x96xf32> to vector<16x96xf32>
    %42 = arith.addf %38, %41 : vector<16x96xf32>
    %c0_21 = arith.constant 0 : index
    %c0_22 = arith.constant 0 : index
    %c0_23 = arith.constant 0 : index
    %43 = vector.load %arg7[%c0_21, %c0_22, %c0_23] : memref<2x32x32xf32, #tpu.memory_space<vmem>>, vector<1x32x32xf32>
    %44 = vector.shape_cast %43 : vector<1x32x32xf32> to vector<32x32xf32>
    %45 = vector.extract_strided_slice %42 {offsets = [0, 0], sizes = [16, 16], strides = [1, 1]} : vector<16x96xf32> to vector<16x16xf32>
    %46 = vector.extract_strided_slice %42 {offsets = [0, 32], sizes = [16, 16], strides = [1, 1]} : vector<16x96xf32> to vector<16x16xf32>
    %47 = vector.extract_strided_slice %42 {offsets = [0, 64], sizes = [16, 16], strides = [1, 1]} : vector<16x96xf32> to vector<16x16xf32>
    %cst_24 = arith.constant dense<0.000000e+00> : vector<16x16xf32>
    %48 = tpu.matmul %45, %46, %cst_24 {dimension_numbers = #tpu.dot_dimension_numbers<[1], [1], [0], [0], [0, 0, 1, 0], [], []>} : vector<16x16xf32>, vector<16x16xf32>, vector<16x16xf32> -> vector<16x16xf32>
    %cst_25 = arith.constant 2.500000e-01 : f32
    %49 = vector.broadcast %cst_25 : f32 to vector<16x16xf32>
    %50 = arith.mulf %48, %49 : vector<16x16xf32>
    %51 = arith.addf %50, %1 : vector<16x16xf32>
    %cst_26 = arith.constant dense<0xFF800000> : vector<16xf32>
    %52 = vector.multi_reduction <maximumf>, %51, %cst_26 [1] : vector<16x16xf32> to vector<16xf32>
    %53 = vector.shape_cast %52 : vector<16xf32> to vector<16x1xf32>
    %54 = vector.broadcast %53 : vector<16x1xf32> to vector<16x16xf32>
    %55 = arith.subf %51, %54 : vector<16x16xf32>
    %56 = math.exp %55 : vector<16x16xf32>
    %cst_27 = arith.constant dense<0.000000e+00> : vector<16xf32>
    %57 = vector.multi_reduction <add>, %56, %cst_27 [1] : vector<16x16xf32> to vector<16xf32>
    %58 = vector.shape_cast %57 : vector<16xf32> to vector<16x1xf32>
    %59 = tpu.reciprocal %58 {approx = true} : vector<16x1xf32> -> vector<16x1xf32>
    %60 = vector.broadcast %59 : vector<16x1xf32> to vector<16x16xf32>
    %61 = arith.mulf %56, %60 : vector<16x16xf32>
    %cst_28 = arith.constant dense<0.000000e+00> : vector<16x16xf32>
    %62 = tpu.matmul %61, %47, %cst_28 {dimension_numbers = #tpu.dot_dimension_numbers<[1], [0], [0], [1], [0, 0, 1, 1], [], []>} : vector<16x16xf32>, vector<16x16xf32>, vector<16x16xf32> -> vector<16x16xf32>
    %63 = vector.extract_strided_slice %44 {offsets = [0, 0], sizes = [16, 32], strides = [1, 1]} : vector<32x32xf32> to vector<16x32xf32>
    %cst_29 = arith.constant dense<0.000000e+00> : vector<16x32xf32>
    %64 = tpu.matmul %62, %63, %cst_29 {dimension_numbers = #tpu.dot_dimension_numbers<[1], [0], [0], [1], [0, 0, 1, 1], [], []>} : vector<16x16xf32>, vector<16x32xf32>, vector<16x32xf32> -> vector<16x32xf32>
    %65 = vector.extract_strided_slice %42 {offsets = [0, 16], sizes = [16, 16], strides = [1, 1]} : vector<16x96xf32> to vector<16x16xf32>
    %66 = vector.extract_strided_slice %42 {offsets = [0, 48], sizes = [16, 16], strides = [1, 1]} : vector<16x96xf32> to vector<16x16xf32>
    %67 = vector.extract_strided_slice %42 {offsets = [0, 80], sizes = [16, 16], strides = [1, 1]} : vector<16x96xf32> to vector<16x16xf32>
    %cst_30 = arith.constant dense<0.000000e+00> : vector<16x16xf32>
    %68 = tpu.matmul %65, %66, %cst_30 {dimension_numbers = #tpu.dot_dimension_numbers<[1], [1], [0], [0], [0, 0, 1, 0], [], []>} : vector<16x16xf32>, vector<16x16xf32>, vector<16x16xf32> -> vector<16x16xf32>
    %cst_31 = arith.constant 2.500000e-01 : f32
    %69 = vector.broadcast %cst_31 : f32 to vector<16x16xf32>
    %70 = arith.mulf %68, %69 : vector<16x16xf32>
    %71 = arith.addf %70, %1 : vector<16x16xf32>
    %cst_32 = arith.constant dense<0xFF800000> : vector<16xf32>
    %72 = vector.multi_reduction <maximumf>, %71, %cst_32 [1] : vector<16x16xf32> to vector<16xf32>
    %73 = vector.shape_cast %72 : vector<16xf32> to vector<16x1xf32>
    %74 = vector.broadcast %73 : vector<16x1xf32> to vector<16x16xf32>
    %75 = arith.subf %71, %74 : vector<16x16xf32>
    %76 = math.exp %75 : vector<16x16xf32>
    %cst_33 = arith.constant dense<0.000000e+00> : vector<16xf32>
    %77 = vector.multi_reduction <add>, %76, %cst_33 [1] : vector<16x16xf32> to vector<16xf32>
    %78 = vector.shape_cast %77 : vector<16xf32> to vector<16x1xf32>
    %79 = tpu.reciprocal %78 {approx = true} : vector<16x1xf32> -> vector<16x1xf32>
    %80 = vector.broadcast %79 : vector<16x1xf32> to vector<16x16xf32>
    %81 = arith.mulf %76, %80 : vector<16x16xf32>
    %cst_34 = arith.constant dense<0.000000e+00> : vector<16x16xf32>
    %82 = tpu.matmul %81, %67, %cst_34 {dimension_numbers = #tpu.dot_dimension_numbers<[1], [0], [0], [1], [0, 0, 1, 1], [], []>} : vector<16x16xf32>, vector<16x16xf32>, vector<16x16xf32> -> vector<16x16xf32>
    %83 = vector.extract_strided_slice %44 {offsets = [16, 0], sizes = [16, 32], strides = [1, 1]} : vector<32x32xf32> to vector<16x32xf32>
    %cst_35 = arith.constant dense<0.000000e+00> : vector<16x32xf32>
    %84 = tpu.matmul %82, %83, %cst_35 {dimension_numbers = #tpu.dot_dimension_numbers<[1], [0], [0], [1], [0, 0, 1, 1], [], []>} : vector<16x16xf32>, vector<16x32xf32>, vector<16x32xf32> -> vector<16x32xf32>
    %85 = arith.addf %64, %84 : vector<16x32xf32>
    %c0_36 = arith.constant 0 : index
    %c0_37 = arith.constant 0 : index
    %c0_38 = arith.constant 0 : index
    %86 = vector.load %arg8[%c0_36, %c0_37, %c0_38] : memref<2x1x32xf32, #tpu.memory_space<vmem>>, vector<1x1x32xf32>
    %87 = vector.shape_cast %86 : vector<1x1x32xf32> to vector<1x32xf32>
    %88 = vector.broadcast %87 : vector<1x32xf32> to vector<16x32xf32>
    %89 = arith.addf %85, %88 : vector<16x32xf32>
    %90 = arith.addf %89, %35 : vector<16x32xf32>
    %91 = vector.extract_strided_slice %0 {offsets = [2, 0], sizes = [1, 32], strides = [1, 1]} : vector<10x32xf32> to vector<1x32xf32>
    %92 = vector.extract_strided_slice %0 {offsets = [3, 0], sizes = [1, 32], strides = [1, 1]} : vector<10x32xf32> to vector<1x32xf32>
    %cst_39 = arith.constant dense<0.000000e+00> : vector<16xf32>
    %93 = vector.multi_reduction <add>, %90, %cst_39 [1] : vector<16x32xf32> to vector<16xf32>
    %94 = vector.shape_cast %93 : vector<16xf32> to vector<16x1xf32>
    %cst_40 = arith.constant 3.200000e+01 : f32
    %95 = vector.broadcast %cst_40 : f32 to vector<16x1xf32>
    %96 = arith.divf %94, %95 : vector<16x1xf32>
    %97 = vector.broadcast %96 : vector<16x1xf32> to vector<16x32xf32>
    %98 = arith.subf %90, %97 : vector<16x32xf32>
    %99 = arith.mulf %98, %98 : vector<16x32xf32>
    %cst_41 = arith.constant dense<0.000000e+00> : vector<16xf32>
    %100 = vector.multi_reduction <add>, %99, %cst_41 [1] : vector<16x32xf32> to vector<16xf32>
    %101 = vector.shape_cast %100 : vector<16xf32> to vector<16x1xf32>
    %cst_42 = arith.constant 3.200000e+01 : f32
    %102 = vector.broadcast %cst_42 : f32 to vector<16x1xf32>
    %103 = arith.divf %101, %102 : vector<16x1xf32>
    %104 = vector.broadcast %96 : vector<16x1xf32> to vector<16x32xf32>
    %105 = arith.subf %90, %104 : vector<16x32xf32>
    %cst_43 = arith.constant 9.99999996E-13 : f32
    %106 = vector.broadcast %cst_43 : f32 to vector<16x1xf32>
    %107 = arith.addf %103, %106 : vector<16x1xf32>
    %108 = math.rsqrt %107 : vector<16x1xf32>
    %109 = vector.broadcast %108 : vector<16x1xf32> to vector<16x32xf32>
    %110 = arith.mulf %105, %109 : vector<16x32xf32>
    %111 = vector.broadcast %91 : vector<1x32xf32> to vector<16x32xf32>
    %112 = arith.mulf %110, %111 : vector<16x32xf32>
    %113 = vector.broadcast %92 : vector<1x32xf32> to vector<16x32xf32>
    %114 = arith.addf %112, %113 : vector<16x32xf32>
    %c0_44 = arith.constant 0 : index
    %c0_45 = arith.constant 0 : index
    %c0_46 = arith.constant 0 : index
    %115 = vector.load %arg9[%c0_44, %c0_45, %c0_46] : memref<2x32x128xf32, #tpu.memory_space<vmem>>, vector<1x32x128xf32>
    %116 = vector.shape_cast %115 : vector<1x32x128xf32> to vector<32x128xf32>
    %cst_47 = arith.constant dense<0.000000e+00> : vector<16x128xf32>
    %117 = tpu.matmul %114, %116, %cst_47 {dimension_numbers = #tpu.dot_dimension_numbers<[1], [0], [0], [1], [0, 0, 1, 1], [], []>} : vector<16x32xf32>, vector<32x128xf32>, vector<16x128xf32> -> vector<16x128xf32>
    %c0_48 = arith.constant 0 : index
    %c0_49 = arith.constant 0 : index
    %c0_50 = arith.constant 0 : index
    %118 = vector.load %arg10[%c0_48, %c0_49, %c0_50] : memref<2x1x128xf32, #tpu.memory_space<vmem>>, vector<1x1x128xf32>
    %119 = vector.shape_cast %118 : vector<1x1x128xf32> to vector<1x128xf32>
    %120 = vector.broadcast %119 : vector<1x128xf32> to vector<16x128xf32>
    %121 = arith.addf %117, %120 : vector<16x128xf32>
    %cst_51 = arith.constant 5.000000e-01 : f32
    %122 = vector.broadcast %cst_51 : f32 to vector<16x128xf32>
    %123 = arith.mulf %122, %121 : vector<16x128xf32>
    %cst_52 = arith.constant 4.471500e-02 : f32
    %124 = vector.broadcast %cst_52 : f32 to vector<16x128xf32>
    %125 = arith.mulf %124, %121 : vector<16x128xf32>
    %126 = arith.mulf %125, %121 : vector<16x128xf32>
    %127 = arith.mulf %126, %121 : vector<16x128xf32>
    %128 = arith.addf %121, %127 : vector<16x128xf32>
    %cst_53 = arith.constant 0.797884583 : f32
    %129 = vector.broadcast %cst_53 : f32 to vector<16x128xf32>
    %130 = arith.mulf %129, %128 : vector<16x128xf32>
    %131 = math.tanh %130 : vector<16x128xf32>
    %cst_54 = arith.constant 1.000000e+00 : f32
    %132 = vector.broadcast %cst_54 : f32 to vector<16x128xf32>
    %133 = arith.addf %132, %131 : vector<16x128xf32>
    %134 = arith.mulf %123, %133 : vector<16x128xf32>
    %c0_55 = arith.constant 0 : index
    %c0_56 = arith.constant 0 : index
    %c0_57 = arith.constant 0 : index
    %135 = vector.load %arg11[%c0_55, %c0_56, %c0_57] : memref<2x128x32xf32, #tpu.memory_space<vmem>>, vector<1x128x32xf32>
    %136 = vector.shape_cast %135 : vector<1x128x32xf32> to vector<128x32xf32>
    %cst_58 = arith.constant dense<0.000000e+00> : vector<16x32xf32>
    %137 = tpu.matmul %134, %136, %cst_58 {dimension_numbers = #tpu.dot_dimension_numbers<[1], [0], [0], [1], [0, 0, 1, 1], [], []>} : vector<16x128xf32>, vector<128x32xf32>, vector<16x32xf32> -> vector<16x32xf32>
    %c0_59 = arith.constant 0 : index
    %c0_60 = arith.constant 0 : index
    %c0_61 = arith.constant 0 : index
    %138 = vector.load %arg12[%c0_59, %c0_60, %c0_61] : memref<2x1x32xf32, #tpu.memory_space<vmem>>, vector<1x1x32xf32>
    %139 = vector.shape_cast %138 : vector<1x1x32xf32> to vector<1x32xf32>
    %140 = vector.broadcast %139 : vector<1x32xf32> to vector<16x32xf32>
    %141 = arith.addf %137, %140 : vector<16x32xf32>
    %142 = arith.addf %141, %114 : vector<16x32xf32>
    %143 = vector.extract_strided_slice %0 {offsets = [4, 0], sizes = [1, 32], strides = [1, 1]} : vector<10x32xf32> to vector<1x32xf32>
    %144 = vector.extract_strided_slice %0 {offsets = [5, 0], sizes = [1, 32], strides = [1, 1]} : vector<10x32xf32> to vector<1x32xf32>
    %cst_62 = arith.constant dense<0.000000e+00> : vector<16xf32>
    %145 = vector.multi_reduction <add>, %142, %cst_62 [1] : vector<16x32xf32> to vector<16xf32>
    %146 = vector.shape_cast %145 : vector<16xf32> to vector<16x1xf32>
    %cst_63 = arith.constant 3.200000e+01 : f32
    %147 = vector.broadcast %cst_63 : f32 to vector<16x1xf32>
    %148 = arith.divf %146, %147 : vector<16x1xf32>
    %149 = vector.broadcast %148 : vector<16x1xf32> to vector<16x32xf32>
    %150 = arith.subf %142, %149 : vector<16x32xf32>
    %151 = arith.mulf %150, %150 : vector<16x32xf32>
    %cst_64 = arith.constant dense<0.000000e+00> : vector<16xf32>
    %152 = vector.multi_reduction <add>, %151, %cst_64 [1] : vector<16x32xf32> to vector<16xf32>
    %153 = vector.shape_cast %152 : vector<16xf32> to vector<16x1xf32>
    %cst_65 = arith.constant 3.200000e+01 : f32
    %154 = vector.broadcast %cst_65 : f32 to vector<16x1xf32>
    %155 = arith.divf %153, %154 : vector<16x1xf32>
    %156 = vector.broadcast %148 : vector<16x1xf32> to vector<16x32xf32>
    %157 = arith.subf %142, %156 : vector<16x32xf32>
    %cst_66 = arith.constant 9.99999996E-13 : f32
    %158 = vector.broadcast %cst_66 : f32 to vector<16x1xf32>
    %159 = arith.addf %155, %158 : vector<16x1xf32>
    %160 = math.rsqrt %159 : vector<16x1xf32>
    %161 = vector.broadcast %160 : vector<16x1xf32> to vector<16x32xf32>
    %162 = arith.mulf %157, %161 : vector<16x32xf32>
    %163 = vector.broadcast %143 : vector<1x32xf32> to vector<16x32xf32>
    %164 = arith.mulf %162, %163 : vector<16x32xf32>
    %165 = vector.broadcast %144 : vector<1x32xf32> to vector<16x32xf32>
    %166 = arith.addf %164, %165 : vector<16x32xf32>
    %c1 = arith.constant 1 : index
    %c0_67 = arith.constant 0 : index
    %c0_68 = arith.constant 0 : index
    %167 = vector.load %arg5[%c1, %c0_67, %c0_68] : memref<2x32x96xf32, #tpu.memory_space<vmem>>, vector<1x32x96xf32>
    %168 = vector.shape_cast %167 : vector<1x32x96xf32> to vector<32x96xf32>
    %cst_69 = arith.constant dense<0.000000e+00> : vector<16x96xf32>
    %169 = tpu.matmul %166, %168, %cst_69 {dimension_numbers = #tpu.dot_dimension_numbers<[1], [0], [0], [1], [0, 0, 1, 1], [], []>} : vector<16x32xf32>, vector<32x96xf32>, vector<16x96xf32> -> vector<16x96xf32>
    %c1_70 = arith.constant 1 : index
    %c0_71 = arith.constant 0 : index
    %c0_72 = arith.constant 0 : index
    %170 = vector.load %arg6[%c1_70, %c0_71, %c0_72] : memref<2x1x96xf32, #tpu.memory_space<vmem>>, vector<1x1x96xf32>
    %171 = vector.shape_cast %170 : vector<1x1x96xf32> to vector<1x96xf32>
    %172 = vector.broadcast %171 : vector<1x96xf32> to vector<16x96xf32>
    %173 = arith.addf %169, %172 : vector<16x96xf32>
    %c1_73 = arith.constant 1 : index
    %c0_74 = arith.constant 0 : index
    %c0_75 = arith.constant 0 : index
    %174 = vector.load %arg7[%c1_73, %c0_74, %c0_75] : memref<2x32x32xf32, #tpu.memory_space<vmem>>, vector<1x32x32xf32>
    %175 = vector.shape_cast %174 : vector<1x32x32xf32> to vector<32x32xf32>
    %176 = vector.extract_strided_slice %173 {offsets = [0, 0], sizes = [16, 16], strides = [1, 1]} : vector<16x96xf32> to vector<16x16xf32>
    %177 = vector.extract_strided_slice %173 {offsets = [0, 32], sizes = [16, 16], strides = [1, 1]} : vector<16x96xf32> to vector<16x16xf32>
    %178 = vector.extract_strided_slice %173 {offsets = [0, 64], sizes = [16, 16], strides = [1, 1]} : vector<16x96xf32> to vector<16x16xf32>
    %cst_76 = arith.constant dense<0.000000e+00> : vector<16x16xf32>
    %179 = tpu.matmul %176, %177, %cst_76 {dimension_numbers = #tpu.dot_dimension_numbers<[1], [1], [0], [0], [0, 0, 1, 0], [], []>} : vector<16x16xf32>, vector<16x16xf32>, vector<16x16xf32> -> vector<16x16xf32>
    %cst_77 = arith.constant 2.500000e-01 : f32
    %180 = vector.broadcast %cst_77 : f32 to vector<16x16xf32>
    %181 = arith.mulf %179, %180 : vector<16x16xf32>
    %182 = arith.addf %181, %1 : vector<16x16xf32>
    %cst_78 = arith.constant dense<0xFF800000> : vector<16xf32>
    %183 = vector.multi_reduction <maximumf>, %182, %cst_78 [1] : vector<16x16xf32> to vector<16xf32>
    %184 = vector.shape_cast %183 : vector<16xf32> to vector<16x1xf32>
    %185 = vector.broadcast %184 : vector<16x1xf32> to vector<16x16xf32>
    %186 = arith.subf %182, %185 : vector<16x16xf32>
    %187 = math.exp %186 : vector<16x16xf32>
    %cst_79 = arith.constant dense<0.000000e+00> : vector<16xf32>
    %188 = vector.multi_reduction <add>, %187, %cst_79 [1] : vector<16x16xf32> to vector<16xf32>
    %189 = vector.shape_cast %188 : vector<16xf32> to vector<16x1xf32>
    %190 = tpu.reciprocal %189 {approx = true} : vector<16x1xf32> -> vector<16x1xf32>
    %191 = vector.broadcast %190 : vector<16x1xf32> to vector<16x16xf32>
    %192 = arith.mulf %187, %191 : vector<16x16xf32>
    %cst_80 = arith.constant dense<0.000000e+00> : vector<16x16xf32>
    %193 = tpu.matmul %192, %178, %cst_80 {dimension_numbers = #tpu.dot_dimension_numbers<[1], [0], [0], [1], [0, 0, 1, 1], [], []>} : vector<16x16xf32>, vector<16x16xf32>, vector<16x16xf32> -> vector<16x16xf32>
    %194 = vector.extract_strided_slice %175 {offsets = [0, 0], sizes = [16, 32], strides = [1, 1]} : vector<32x32xf32> to vector<16x32xf32>
    %cst_81 = arith.constant dense<0.000000e+00> : vector<16x32xf32>
    %195 = tpu.matmul %193, %194, %cst_81 {dimension_numbers = #tpu.dot_dimension_numbers<[1], [0], [0], [1], [0, 0, 1, 1], [], []>} : vector<16x16xf32>, vector<16x32xf32>, vector<16x32xf32> -> vector<16x32xf32>
    %196 = vector.extract_strided_slice %173 {offsets = [0, 16], sizes = [16, 16], strides = [1, 1]} : vector<16x96xf32> to vector<16x16xf32>
    %197 = vector.extract_strided_slice %173 {offsets = [0, 48], sizes = [16, 16], strides = [1, 1]} : vector<16x96xf32> to vector<16x16xf32>
    %198 = vector.extract_strided_slice %173 {offsets = [0, 80], sizes = [16, 16], strides = [1, 1]} : vector<16x96xf32> to vector<16x16xf32>
    %cst_82 = arith.constant dense<0.000000e+00> : vector<16x16xf32>
    %199 = tpu.matmul %196, %197, %cst_82 {dimension_numbers = #tpu.dot_dimension_numbers<[1], [1], [0], [0], [0, 0, 1, 0], [], []>} : vector<16x16xf32>, vector<16x16xf32>, vector<16x16xf32> -> vector<16x16xf32>
    %cst_83 = arith.constant 2.500000e-01 : f32
    %200 = vector.broadcast %cst_83 : f32 to vector<16x16xf32>
    %201 = arith.mulf %199, %200 : vector<16x16xf32>
    %202 = arith.addf %201, %1 : vector<16x16xf32>
    %cst_84 = arith.constant dense<0xFF800000> : vector<16xf32>
    %203 = vector.multi_reduction <maximumf>, %202, %cst_84 [1] : vector<16x16xf32> to vector<16xf32>
    %204 = vector.shape_cast %203 : vector<16xf32> to vector<16x1xf32>
    %205 = vector.broadcast %204 : vector<16x1xf32> to vector<16x16xf32>
    %206 = arith.subf %202, %205 : vector<16x16xf32>
    %207 = math.exp %206 : vector<16x16xf32>
    %cst_85 = arith.constant dense<0.000000e+00> : vector<16xf32>
    %208 = vector.multi_reduction <add>, %207, %cst_85 [1] : vector<16x16xf32> to vector<16xf32>
    %209 = vector.shape_cast %208 : vector<16xf32> to vector<16x1xf32>
    %210 = tpu.reciprocal %209 {approx = true} : vector<16x1xf32> -> vector<16x1xf32>
    %211 = vector.broadcast %210 : vector<16x1xf32> to vector<16x16xf32>
    %212 = arith.mulf %207, %211 : vector<16x16xf32>
    %cst_86 = arith.constant dense<0.000000e+00> : vector<16x16xf32>
    %213 = tpu.matmul %212, %198, %cst_86 {dimension_numbers = #tpu.dot_dimension_numbers<[1], [0], [0], [1], [0, 0, 1, 1], [], []>} : vector<16x16xf32>, vector<16x16xf32>, vector<16x16xf32> -> vector<16x16xf32>
    %214 = vector.extract_strided_slice %175 {offsets = [16, 0], sizes = [16, 32], strides = [1, 1]} : vector<32x32xf32> to vector<16x32xf32>
    %cst_87 = arith.constant dense<0.000000e+00> : vector<16x32xf32>
    %215 = tpu.matmul %213, %214, %cst_87 {dimension_numbers = #tpu.dot_dimension_numbers<[1], [0], [0], [1], [0, 0, 1, 1], [], []>} : vector<16x16xf32>, vector<16x32xf32>, vector<16x32xf32> -> vector<16x32xf32>
    %216 = arith.addf %195, %215 : vector<16x32xf32>
    %c1_88 = arith.constant 1 : index
    %c0_89 = arith.constant 0 : index
    %c0_90 = arith.constant 0 : index
    %217 = vector.load %arg8[%c1_88, %c0_89, %c0_90] : memref<2x1x32xf32, #tpu.memory_space<vmem>>, vector<1x1x32xf32>
    %218 = vector.shape_cast %217 : vector<1x1x32xf32> to vector<1x32xf32>
    %219 = vector.broadcast %218 : vector<1x32xf32> to vector<16x32xf32>
    %220 = arith.addf %216, %219 : vector<16x32xf32>
    %221 = arith.addf %220, %166 : vector<16x32xf32>
    %222 = vector.extract_strided_slice %0 {offsets = [6, 0], sizes = [1, 32], strides = [1, 1]} : vector<10x32xf32> to vector<1x32xf32>
    %223 = vector.extract_strided_slice %0 {offsets = [7, 0], sizes = [1, 32], strides = [1, 1]} : vector<10x32xf32> to vector<1x32xf32>
    %cst_91 = arith.constant dense<0.000000e+00> : vector<16xf32>
    %224 = vector.multi_reduction <add>, %221, %cst_91 [1] : vector<16x32xf32> to vector<16xf32>
    %225 = vector.shape_cast %224 : vector<16xf32> to vector<16x1xf32>
    %cst_92 = arith.constant 3.200000e+01 : f32
    %226 = vector.broadcast %cst_92 : f32 to vector<16x1xf32>
    %227 = arith.divf %225, %226 : vector<16x1xf32>
    %228 = vector.broadcast %227 : vector<16x1xf32> to vector<16x32xf32>
    %229 = arith.subf %221, %228 : vector<16x32xf32>
    %230 = arith.mulf %229, %229 : vector<16x32xf32>
    %cst_93 = arith.constant dense<0.000000e+00> : vector<16xf32>
    %231 = vector.multi_reduction <add>, %230, %cst_93 [1] : vector<16x32xf32> to vector<16xf32>
    %232 = vector.shape_cast %231 : vector<16xf32> to vector<16x1xf32>
    %cst_94 = arith.constant 3.200000e+01 : f32
    %233 = vector.broadcast %cst_94 : f32 to vector<16x1xf32>
    %234 = arith.divf %232, %233 : vector<16x1xf32>
    %235 = vector.broadcast %227 : vector<16x1xf32> to vector<16x32xf32>
    %236 = arith.subf %221, %235 : vector<16x32xf32>
    %cst_95 = arith.constant 9.99999996E-13 : f32
    %237 = vector.broadcast %cst_95 : f32 to vector<16x1xf32>
    %238 = arith.addf %234, %237 : vector<16x1xf32>
    %239 = math.rsqrt %238 : vector<16x1xf32>
    %240 = vector.broadcast %239 : vector<16x1xf32> to vector<16x32xf32>
    %241 = arith.mulf %236, %240 : vector<16x32xf32>
    %242 = vector.broadcast %222 : vector<1x32xf32> to vector<16x32xf32>
    %243 = arith.mulf %241, %242 : vector<16x32xf32>
    %244 = vector.broadcast %223 : vector<1x32xf32> to vector<16x32xf32>
    %245 = arith.addf %243, %244 : vector<16x32xf32>
    %c1_96 = arith.constant 1 : index
    %c0_97 = arith.constant 0 : index
    %c0_98 = arith.constant 0 : index
    %246 = vector.load %arg9[%c1_96, %c0_97, %c0_98] : memref<2x32x128xf32, #tpu.memory_space<vmem>>, vector<1x32x128xf32>
    %247 = vector.shape_cast %246 : vector<1x32x128xf32> to vector<32x128xf32>
    %cst_99 = arith.constant dense<0.000000e+00> : vector<16x128xf32>
    %248 = tpu.matmul %245, %247, %cst_99 {dimension_numbers = #tpu.dot_dimension_numbers<[1], [0], [0], [1], [0, 0, 1, 1], [], []>} : vector<16x32xf32>, vector<32x128xf32>, vector<16x128xf32> -> vector<16x128xf32>
    %c1_100 = arith.constant 1 : index
    %c0_101 = arith.constant 0 : index
    %c0_102 = arith.constant 0 : index
    %249 = vector.load %arg10[%c1_100, %c0_101, %c0_102] : memref<2x1x128xf32, #tpu.memory_space<vmem>>, vector<1x1x128xf32>
    %250 = vector.shape_cast %249 : vector<1x1x128xf32> to vector<1x128xf32>
    %251 = vector.broadcast %250 : vector<1x128xf32> to vector<16x128xf32>
    %252 = arith.addf %248, %251 : vector<16x128xf32>
    %cst_103 = arith.constant 5.000000e-01 : f32
    %253 = vector.broadcast %cst_103 : f32 to vector<16x128xf32>
    %254 = arith.mulf %253, %252 : vector<16x128xf32>
    %cst_104 = arith.constant 4.471500e-02 : f32
    %255 = vector.broadcast %cst_104 : f32 to vector<16x128xf32>
    %256 = arith.mulf %255, %252 : vector<16x128xf32>
    %257 = arith.mulf %256, %252 : vector<16x128xf32>
    %258 = arith.mulf %257, %252 : vector<16x128xf32>
    %259 = arith.addf %252, %258 : vector<16x128xf32>
    %cst_105 = arith.constant 0.797884583 : f32
    %260 = vector.broadcast %cst_105 : f32 to vector<16x128xf32>
    %261 = arith.mulf %260, %259 : vector<16x128xf32>
    %262 = math.tanh %261 : vector<16x128xf32>
    %cst_106 = arith.constant 1.000000e+00 : f32
    %263 = vector.broadcast %cst_106 : f32 to vector<16x128xf32>
    %264 = arith.addf %263, %262 : vector<16x128xf32>
    %265 = arith.mulf %254, %264 : vector<16x128xf32>
    %c1_107 = arith.constant 1 : index
    %c0_108 = arith.constant 0 : index
    %c0_109 = arith.constant 0 : index
    %266 = vector.load %arg11[%c1_107, %c0_108, %c0_109] : memref<2x128x32xf32, #tpu.memory_space<vmem>>, vector<1x128x32xf32>
    %267 = vector.shape_cast %266 : vector<1x128x32xf32> to vector<128x32xf32>
    %cst_110 = arith.constant dense<0.000000e+00> : vector<16x32xf32>
    %268 = tpu.matmul %265, %267, %cst_110 {dimension_numbers = #tpu.dot_dimension_numbers<[1], [0], [0], [1], [0, 0, 1, 1], [], []>} : vector<16x128xf32>, vector<128x32xf32>, vector<16x32xf32> -> vector<16x32xf32>
    %c1_111 = arith.constant 1 : index
    %c0_112 = arith.constant 0 : index
    %c0_113 = arith.constant 0 : index
    %269 = vector.load %arg12[%c1_111, %c0_112, %c0_113] : memref<2x1x32xf32, #tpu.memory_space<vmem>>, vector<1x1x32xf32>
    %270 = vector.shape_cast %269 : vector<1x1x32xf32> to vector<1x32xf32>
    %271 = vector.broadcast %270 : vector<1x32xf32> to vector<16x32xf32>
    %272 = arith.addf %268, %271 : vector<16x32xf32>
    %273 = arith.addf %272, %245 : vector<16x32xf32>
    %274 = vector.extract_strided_slice %0 {offsets = [8, 0], sizes = [1, 32], strides = [1, 1]} : vector<10x32xf32> to vector<1x32xf32>
    %275 = vector.extract_strided_slice %0 {offsets = [9, 0], sizes = [1, 32], strides = [1, 1]} : vector<10x32xf32> to vector<1x32xf32>
    %cst_114 = arith.constant dense<0.000000e+00> : vector<16xf32>
    %276 = vector.multi_reduction <add>, %273, %cst_114 [1] : vector<16x32xf32> to vector<16xf32>
    %277 = vector.shape_cast %276 : vector<16xf32> to vector<16x1xf32>
    %cst_115 = arith.constant 3.200000e+01 : f32
    %278 = vector.broadcast %cst_115 : f32 to vector<16x1xf32>
    %279 = arith.divf %277, %278 : vector<16x1xf32>
    %280 = vector.broadcast %279 : vector<16x1xf32> to vector<16x32xf32>
    %281 = arith.subf %273, %280 : vector<16x32xf32>
    %282 = arith.mulf %281, %281 : vector<16x32xf32>
    %cst_116 = arith.constant dense<0.000000e+00> : vector<16xf32>
    %283 = vector.multi_reduction <add>, %282, %cst_116 [1] : vector<16x32xf32> to vector<16xf32>
    %284 = vector.shape_cast %283 : vector<16xf32> to vector<16x1xf32>
    %cst_117 = arith.constant 3.200000e+01 : f32
    %285 = vector.broadcast %cst_117 : f32 to vector<16x1xf32>
    %286 = arith.divf %284, %285 : vector<16x1xf32>
    %287 = vector.broadcast %279 : vector<16x1xf32> to vector<16x32xf32>
    %288 = arith.subf %273, %287 : vector<16x32xf32>
    %cst_118 = arith.constant 9.99999996E-13 : f32
    %289 = vector.broadcast %cst_118 : f32 to vector<16x1xf32>
    %290 = arith.addf %286, %289 : vector<16x1xf32>
    %291 = math.rsqrt %290 : vector<16x1xf32>
    %292 = vector.broadcast %291 : vector<16x1xf32> to vector<16x32xf32>
    %293 = arith.mulf %288, %292 : vector<16x32xf32>
    %294 = vector.broadcast %274 : vector<1x32xf32> to vector<16x32xf32>
    %295 = arith.mulf %293, %294 : vector<16x32xf32>
    %296 = vector.broadcast %275 : vector<1x32xf32> to vector<16x32xf32>
    %297 = arith.addf %295, %296 : vector<16x32xf32>
    %298 = tpu.iota {dimensions = array<i32: 0>} : vector<2x16xi32>
    %c8_i32 = arith.constant 8 : i32
    %299 = vector.broadcast %c8_i32 : i32 to vector<2x16xi32>
    %300 = arith.muli %298, %299 : vector<2x16xi32>
    %301 = tpu.iota {dimensions = array<i32: 1>} : vector<2x16xi32>
    %302 = arith.cmpi eq, %300, %301 : vector<2x16xi32>
    %303 = arith.extui %302 : vector<2x16xi1> to vector<2x16xi32>
    %304 = arith.sitofp %303 : vector<2x16xi32> to vector<2x16xf32>
    %cst_119 = arith.constant dense<0.000000e+00> : vector<2x32xf32>
    %305 = tpu.matmul %304, %297, %cst_119 {dimension_numbers = #tpu.dot_dimension_numbers<[1], [0], [0], [1], [0, 0, 1, 1], [], []>} : vector<2x16xf32>, vector<16x32xf32>, vector<2x32xf32> -> vector<2x32xf32>
    %c0_120 = arith.constant 0 : index
    %c0_121 = arith.constant 0 : index
    %306 = vector.load %arg13[%c0_120, %c0_121] : memref<32x32xf32, #tpu.memory_space<vmem>>, vector<32x32xf32>
    %cst_122 = arith.constant dense<0.000000e+00> : vector<2x32xf32>
    %307 = tpu.matmul %305, %306, %cst_122 {dimension_numbers = #tpu.dot_dimension_numbers<[1], [0], [0], [1], [0, 0, 1, 1], [], []>} : vector<2x32xf32>, vector<32x32xf32>, vector<2x32xf32> -> vector<2x32xf32>
    %c0_123 = arith.constant 0 : index
    %c0_124 = arith.constant 0 : index
    %308 = vector.load %arg14[%c0_123, %c0_124] : memref<1x32xf32, #tpu.memory_space<vmem>>, vector<1x32xf32>
    %309 = vector.broadcast %308 : vector<1x32xf32> to vector<2x32xf32>
    %310 = arith.addf %307, %309 : vector<2x32xf32>
    %311 = math.tanh %310 : vector<2x32xf32>
    %c0_125 = arith.constant 0 : index
    %c0_126 = arith.constant 0 : index
    %312 = vector.load %arg15[%c0_125, %c0_126] : memref<32x128xf32, #tpu.memory_space<vmem>>, vector<32x128xf32>
    %cst_127 = arith.constant dense<0.000000e+00> : vector<2x128xf32>
    %313 = tpu.matmul %311, %312, %cst_127 {dimension_numbers = #tpu.dot_dimension_numbers<[1], [0], [0], [1], [0, 0, 1, 1], [], []>} : vector<2x32xf32>, vector<32x128xf32>, vector<2x128xf32> -> vector<2x128xf32>
    %c0_128 = arith.constant 0 : index
    %c0_129 = arith.constant 0 : index
    %314 = vector.load %arg16[%c0_128, %c0_129] : memref<1x128xf32, #tpu.memory_space<vmem>>, vector<1x128xf32>
    %315 = vector.broadcast %314 : vector<1x128xf32> to vector<2x128xf32>
    %316 = arith.addf %313, %315 : vector<2x128xf32>
    %cst_130 = arith.constant 0.000000e+00 : f32
    %317 = vector.broadcast %cst_130 : f32 to vector<2x128xf32>
    %318 = arith.subf %317, %316 : vector<2x128xf32>
    %319 = math.exp %318 : vector<2x128xf32>
    %cst_131 = arith.constant 1.000000e+00 : f32
    %320 = vector.broadcast %cst_131 : f32 to vector<2x128xf32>
    %321 = arith.addf %320, %319 : vector<2x128xf32>
    %cst_132 = arith.constant 1.000000e+00 : f32
    %322 = vector.broadcast %cst_132 : f32 to vector<2x128xf32>
    %323 = arith.divf %322, %321 : vector<2x128xf32>
    %c0_133 = arith.constant 0 : index
    %c0_134 = arith.constant 0 : index
    %324 = vector.load %arg17[%c0_133, %c0_134] : memref<2x128xf32, #tpu.memory_space<vmem>>, vector<2x128xf32>
    tpu.vector_store %arg17[%c0_133, %c0_134], %323 {strides = array<i32>} : memref<2x128xf32, #tpu.memory_space<vmem>>, vector<2x128xf32>,
    return
  }
}

</mosaic_0001>

<llo_original>
// kernel: riskbert_forward.1
$region0: #{riskbert_forward.1}
  #allocation0 [shape = 'u32[]', space=smem, size = 0x4, offset = 0x4, fixed_abs, tag = 'smem constant byte address 0x4 - core index']
  #allocation1 [shape = 'u32[144,128]{1,0:T(1,128)}', space=vmem, size = 0x12000, scoped, tag = 'internal scratch']
  %s0 = inlined_call_operand.vmem [shape: s32[16,1], index: 0, kind: input, shape index: {}]
  %s1 = inlined_call_operand.vmem [shape: f32[16,16], index: 1, kind: input, shape index: {}]
  %s2 = inlined_call_operand.vmem [shape: f32[100,32], index: 2, kind: input, shape index: {}]
  %s3 = inlined_call_operand.vmem [shape: f32[16,32], index: 3, kind: input, shape index: {}]
  %s4 = inlined_call_operand.vmem [shape: f32[10,32], index: 4, kind: input, shape index: {}]
  %s5 = inlined_call_operand.vmem [shape: f32[2,32,96], index: 5, kind: input, shape index: {}]
  %s6 = inlined_call_operand.vmem [shape: f32[2,1,96], index: 6, kind: input, shape index: {}]
  %s7 = inlined_call_operand.vmem [shape: f32[2,32,32], index: 7, kind: input, shape index: {}]
  %s8 = inlined_call_operand.vmem [shape: f32[2,1,32], index: 8, kind: input, shape index: {}]
  %s9 = inlined_call_operand.vmem [shape: f32[2,32,128], index: 9, kind: input, shape index: {}]
  %s10 = inlined_call_operand.vmem [shape: f32[2,1,128], index: 10, kind: input, shape index: {}]
  %s11 = inlined_call_operand.vmem [shape: f32[2,128,32], index: 11, kind: input, shape index: {}]
  %s12 = inlined_call_operand.vmem [shape: f32[2,1,32], index: 12, kind: input, shape index: {}]
  %s13 = inlined_call_operand.vmem [shape: f32[32,32], index: 13, kind: input, shape index: {}]
  %s14 = inlined_call_operand.vmem [shape: f32[1,32], index: 14, kind: input, shape index: {}]
  %s15 = inlined_call_operand.vmem [shape: f32[32,128], index: 15, kind: input, shape index: {}]
  %s16 = inlined_call_operand.vmem [shape: f32[1,128], index: 16, kind: input, shape index: {}]
  %s17 = inlined_call_operand.vmem [shape: f32[2,128], index: 17, kind: output, shape index: {}]
  %s18 = sld [smem:[#allocation0]]
  $region78: #{riskbert_forward.1} parent=0
    _
  %s20 = ssub.s32 1, %s18
  %s21 = scalar_select 0, %s20, %s18
  // Predicated region
  $region2: #{riskbert_forward.1} parent=0 // pred_check
    _
  $region3: #{riskbert_forward.1} parent=0 // pred_check_branch
    %23 = sbr.rel (0) target = $region5
  $region4: #{riskbert_forward.1} parent=0 // pred_region
    _
  $region5: #{riskbert_forward.1} parent=0 // pred_fallthru
    _
  // Predicated region
  $region6: #{riskbert_forward.1} parent=0 // pred_check
    _
  $region7: #{riskbert_forward.1} parent=0 // pred_check_branch
    %25 = sbr.rel (0) target = $region9
  $region8: #{riskbert_forward.1} parent=0 // pred_region
    _
  $region9: #{riskbert_forward.1} parent=0 // pred_fallthru
    _
  // Predicated region
  $region10: #{riskbert_forward.1} parent=0 // pred_check
    _
  $region11: #{riskbert_forward.1} parent=0 // pred_check_branch
    %27 = sbr.rel (0) target = $region13
  $region12: #{riskbert_forward.1} parent=0 // pred_region
    _
  $region13: #{riskbert_forward.1} parent=0 // pred_fallthru
    _
  // Predicated region
  $region14: #{riskbert_forward.1} parent=0 // pred_check
    _
  $region15: #{riskbert_forward.1} parent=0 // pred_check_branch
    %29 = sbr.rel (0) target = $region17
  $region16: #{riskbert_forward.1} parent=0 // pred_region
    _
  $region17: #{riskbert_forward.1} parent=0 // pred_fallthru
    _
  // Predicated region
  $region18: #{riskbert_forward.1} parent=0 // pred_check
    _
  $region19: #{riskbert_forward.1} parent=0 // pred_check_branch
    %31 = sbr.rel (0) target = $region21
  $region20: #{riskbert_forward.1} parent=0 // pred_region
    _
  $region21: #{riskbert_forward.1} parent=0 // pred_fallthru
    _
  // Predicated region
  $region22: #{riskbert_forward.1} parent=0 // pred_check
    _
  $region23: #{riskbert_forward.1} parent=0 // pred_check_branch
    %33 = sbr.rel (0) target = $region25
  $region24: #{riskbert_forward.1} parent=0 // pred_region
    _
  $region25: #{riskbert_forward.1} parent=0 // pred_fallthru
    _
  // Predicated region
  $region26: #{riskbert_forward.1} parent=0 // pred_check
    _
  $region27: #{riskbert_forward.1} parent=0 // pred_check_branch
    %35 = sbr.rel (0) target = $region29
  $region28: #{riskbert_forward.1} parent=0 // pred_region
    _
  $region29: #{riskbert_forward.1} parent=0 // pred_fallthru
    _
  // Predicated region
  $region30: #{riskbert_forward.1} parent=0 // pred_check
    _
  $region31: #{riskbert_forward.1} parent=0 // pred_check_branch
    %37 = sbr.rel (0) target = $region33
  $region32: #{riskbert_forward.1} parent=0 // pred_region
    _
  $region33: #{riskbert_forward.1} parent=0 // pred_fallthru
    _
  // Predicated region
  $region34: #{riskbert_forward.1} parent=0 // pred_check
    _
  $region35: #{riskbert_forward.1} parent=0 // pred_check_branch
    %39 = sbr.rel (0) target = $region37
  $region36: #{riskbert_forward.1} parent=0 // pred_region
    _
  $region37: #{riskbert_forward.1} parent=0 // pred_fallthru
    _
  // Predicated region
  $region38: #{riskbert_forward.1} parent=0 // pred_check
    _
  $region39: #{riskbert_forward.1} parent=0 // pred_check_branch
    %41 = sbr.rel (0) target = $region41
  $region40: #{riskbert_forward.1} parent=0 // pred_region
    _
  $region41: #{riskbert_forward.1} parent=0 // pred_fallthru
    _
  // Predicated region
  $region42: #{riskbert_forward.1} parent=0 // pred_check
    _
  $region43: #{riskbert_forward.1} parent=0 // pred_check_branch
    %43 = sbr.rel (0) target = $region45
  $region44: #{riskbert_forward.1} parent=0 // pred_region
    _
  $region45: #{riskbert_forward.1} parent=0 // pred_fallthru
    _
  // Predicated region
  $region46: #{riskbert_forward.1} parent=0 // pred_check
    _
  $region47: #{riskbert_forward.1} parent=0 // pred_check_branch
    %45 = sbr.rel (0) target = $region49
  $region48: #{riskbert_forward.1} parent=0 // pred_region
    _
  $region49: #{riskbert_forward.1} parent=0 // pred_fallthru
    _
  // Predicated region
  $region50: #{riskbert_forward.1} parent=0 // pred_check
    _
  $region51: #{riskbert_forward.1} parent=0 // pred_check_branch
    %47 = sbr.rel (0) target = $region53
  $region52: #{riskbert_forward.1} parent=0 // pred_region
    _
  $region53: #{riskbert_forward.1} parent=0 // pred_fallthru
    _
  // Predicated region
  $region54: #{riskbert_forward.1} parent=0 // pred_check
    _
  $region55: #{riskbert_forward.1} parent=0 // pred_check_branch
    %49 = sbr.rel (0) target = $region57
  $region56: #{riskbert_forward.1} parent=0 // pred_region
    _
  $region57: #{riskbert_forward.1} parent=0 // pred_fallthru
    _
  // Predicated region
  $region58: #{riskbert_forward.1} parent=0 // pred_check
    _
  $region59: #{riskbert_forward.1} parent=0 // pred_check_branch
    %51 = sbr.rel (0) target = $region61
  $region60: #{riskbert_forward.1} parent=0 // pred_region
    _
  $region61: #{riskbert_forward.1} parent=0 // pred_fallthru
    _
  // Predicated region
  $region62: #{riskbert_forward.1} parent=0 // pred_check
    _
  $region63: #{riskbert_forward.1} parent=0 // pred_check_branch
    %53 = sbr.rel (0) target = $region65
  $region64: #{riskbert_forward.1} parent=0 // pred_region
    _
  $region65: #{riskbert_forward.1} parent=0 // pred_fallthru
    _
  // Predicated region
  $region66: #{riskbert_forward.1} parent=0 // pred_check
    _
  $region67: #{riskbert_forward.1} parent=0 // pred_check_branch
    %55 = sbr.rel (0) target = $region69
  $region68: #{riskbert_forward.1} parent=0 // pred_region
    _
  $region69: #{riskbert_forward.1} parent=0 // pred_fallthru
    _
  %v56 = vld [vmem:[%s4] sm:$0xff]
  %v57 = vld [vmem:[%s4 + $0x8] sm:$0x3]
  %v58 = vld [vmem:[%s1] sm:$0xff]
  %v59 = vld [vmem:[%s1 + $0x8] sm:$0xff]
  %v60 = vld [vmem:[%s0] sm:$0xff]
  %v61 = vld [vmem:[%s0 + $0x8] sm:$0xff]
  %v62 = vlaneseq
  %v63 = vand.u32 %v62, 127
  %64 = vset.pattern.permute.xlu0 0
  %65 = vperm.xlu0 %64, %v60
  %v66 = vpop.permute.xlu0 %65
  %67 = vset.pattern.permute.xlu0 0
  %68 = vperm.xlu0 %67, %v61
  %v69 = vpop.permute.xlu0 %68
  %vm70 = vcmp.eq.s32.totalorder %v63, %v66
  %vm71 = vcmp.eq.s32.totalorder %v63, %v69
  %v72 = vsel %vm70, 1, 0
  %v73 = vsel %vm71, 1, 0
  %v74 = vcvt.s32.f32 %v72
  %v75 = vcvt.s32.f32 %v73
  %v76 = vld [vmem:[%s2] sm:$0xff]
  %v77 = vld [vmem:[%s2 + $0x8] sm:$0xff]
  %v78 = vld [vmem:[%s2 + $0x10] sm:$0xff]
  %v79 = vld [vmem:[%s2 + $0x18] sm:$0xff]
  %v80 = vld [vmem:[%s2 + $0x20] sm:$0xff]
  %v81 = vld [vmem:[%s2 + $0x28] sm:$0xff]
  %v82 = vld [vmem:[%s2 + $0x30] sm:$0xff]
  %v83 = vld [vmem:[%s2 + $0x38] sm:$0xff]
  %v84 = vld [vmem:[%s2 + $0x40] sm:$0xff]
  %v85 = vld [vmem:[%s2 + $0x48] sm:$0xff]
  %v86 = vld [vmem:[%s2 + $0x50] sm:$0xff]
  %v87 = vld [vmem:[%s2 + $0x58] sm:$0xff]
  %v88 = vld [vmem:[%s2 + $0x60] sm:$0xf]
  %v89 = vld [vmem:[%s3] sm:$0xff]
  %v90 = vld [vmem:[%s3 + $0x8] sm:$0xff]
  %vm91 = vcmask 818176
  %v93 = vsel %vm91, %v74, 0
  %v96 = vsel %vm91, %v75, 0
  %vm98 = vcmask 1043456
  %v100 = vsel %vm98, %v88, 0
  %102 = vmatprep.subr.mxu0 0.0
  %103 = vmatpush1.msra.mxu0 %v76
  %104 = vmatprep.subr.mxu0 0.0
  %105 = vmatpush1.msra.mxu0 %v77
  %106 = vmatprep.subr.mxu0 0.0
  %107 = vmatpush1.msra.mxu0 %v78
  %108 = vmatprep.subr.mxu0 0.0
  %109 = vmatpush1.msra.mxu0 %v79
  %110 = vmatprep.subr.mxu0 0.0
  %111 = vmatpush1.msra.mxu0 %v80
  %112 = vmatprep.subr.mxu0 0.0
  %113 = vmatpush1.msra.mxu0 %v81
  %114 = vmatprep.subr.mxu0 0.0
  %115 = vmatpush1.msra.mxu0 %v82
  %116 = vmatprep.subr.mxu0 0.0
  %117 = vmatpush1.msra.mxu0 %v83
  %118 = vmatprep.subr.mxu0 0.0
  %119 = vmatpush1.msra.mxu0 %v84
  %120 = vmatprep.subr.mxu0 0.0
  %121 = vmatpush1.msra.mxu0 %v85
  %122 = vmatprep.subr.mxu0 0.0
  %123 = vmatpush1.msra.mxu0 %v86
  %124 = vmatprep.subr.mxu0 0.0
  %125 = vmatpush1.msra.mxu0 %v87
  %126 = vmatprep.subr.mxu0 0.0
  %127 = vmatpush1.msra.mxu0 %v100
  %128 = vmatprep.subr.mxu0 0.0
  %129 = vmatpush1.msra.mxu0 0.0
  %130 = vmatprep.subr.mxu0 0.0
  %131 = vmatpush1.msra.mxu0 0.0
  %132 = vmatprep.subr.mxu0 0.0
  %133 = vmatpush1.msra.mxu0 0.0
  %134 = vmatprep.subr.mxu0 0.0
  %135 = vmatpush1.msra.mxu0 0.0
  %136 = vmatprep.subr.mxu0 0.0
  %137 = vmatpush1.msra.mxu0 0.0
  %138 = vmatprep.subr.mxu0 0.0
  %139 = vmatpush1.msra.mxu0 0.0
  %140 = vmatprep.subr.mxu0 0.0
  %141 = vmatpush1.msra.mxu0 0.0
  %142 = vmatprep.subr.mxu0 0.0
  %143 = vmatpush1.msra.mxu0 0.0
  %144 = vmatprep.subr.mxu0 0.0
  %145 = vmatpush1.msra.mxu0 0.0
  %146 = vmatprep.subr.mxu0 0.0
  %147 = vmatpush1.msra.mxu0 0.0
  %148 = vmatprep.subr.mxu0 0.0
  %149 = vmatpush1.msra.mxu0 0.0
  %150 = vmatprep.subr.mxu0 0.0
  %151 = vmatpush1.msra.mxu0 0.0
  %152 = vmatprep.subr.mxu0 0.0
  %153 = vmatpush1.msra.mxu0 0.0
  %154 = vmatprep.subr.mxu0 0.0
  %155 = vmatpush1.msra.mxu0 0.0
  %156 = vmatprep.subr.mxu0 0.0
  %157 = vmatpush1.msra.mxu0 0.0
  %158 = vmatprep.subr.mxu0 0.0
  %159 = vmatpush1.msra.mxu0 0.0
  %160 = vmatprep.subr.mxu0 0.0
  %161 = vmatpush1.msra.mxu0 0.0
  %162 = vmatprep.subr.mxu0 0.0
  %163 = vmatpush1.msra.mxu0 0.0
  %164 = vmatprep.subr.mxu0 0.0
  %165 = vmatpush1.msra.mxu0 0.0
  %166 = vmatprep.mubr.f32.mxu0 0.0
  %167 = vmatmul.mubr.f32.gmra.mrb[0].mxu0 %v93
  %v168 = vpop.f32.mrb[0].mxu0
  %v169 = vadd.f32 %v89, %v168
  %v170 = vpop.f32.mrb[0].mxu0
  %171 = vmatprep.mubr.f32.mxu0 0.0
  %172 = vmatmul.mubr.f32.gmra.mrb[0].mxu0 %v96
  %v173 = vpop.f32.mrb[0].mxu0
  %v174 = vadd.f32 %v90, %v173
  %v175 = vpop.f32.mrb[0].mxu0
  %176 = vdwg.mxu0
  %vm177 = vcmask 261120
  %v178 = vsel %vm177, %v169, 0.0
  %179 = vadd.xlane.f32.xlu0 %v178
  %v180 = vpop.xlane.xlu0 %179
  %v181 = vsel %vm177, %v174, 0.0
  %182 = vadd.xlane.f32.xlu0 %v181
  %v183 = vpop.xlane.xlu0 %182
  %v184 = vrcp.pop 32.0
  %v185 = vmul.f32 %v180, %v184
  %v186 = vmul.f32 %v183, %v184
  %v187 = vsub.f32 %v169, %v185
  %v188 = vsub.f32 %v174, %v186
  %v189 = vmul.f32 %v187, %v187
  %v190 = vmul.f32 %v188, %v188
  %v191 = vsel %vm177, %v189, 0.0
  %192 = vadd.xlane.f32.xlu0 %v191
  %v193 = vpop.xlane.xlu0 %192
  %v194 = vsel %vm177, %v190, 0.0
  %195 = vadd.xlane.f32.xlu0 %v194
  %v196 = vpop.xlane.xlu0 %195
  %v197 = vmul.f32 %v193, %v184
  %v198 = vmul.f32 %v196, %v184
  %v199 = vadd.f32 %v197, 1e-12
  %v200 = vadd.f32 %v198, 1e-12
  %v201 = vrsqrt.pop %v199
  %v202 = vrsqrt.pop %v200
  %v203 = vmul.f32 %v187, %v201
  %v204 = vmul.f32 %v188, %v202
  %v205 = vlaneseq
  %v206 = vshrl.u32 %v205, 7
  %v207 = vsub.s32 0, %v206
  %v208 = vrot.slane %v56, %v207
  %v209 = vmul.f32 %v203, %v208
  %v210 = vmul.f32 %v204, %v208
  %v211 = vlaneseq
  %v212 = vshrl.u32 %v211, 7
  %v213 = vsub.s32 1, %v212
  %v214 = vrot.slane %v56, %v213
  %v215 = vadd.f32 %v209, %v214
  %v216 = vadd.f32 %v210, %v214
  %v217 = vld [vmem:[%s5] sm:$0xff]
  %v218 = vld [vmem:[%s5 + $0x8] sm:$0xff]
  %v219 = vld [vmem:[%s5 + $0x10] sm:$0xff]
  %v220 = vld [vmem:[%s5 + $0x18] sm:$0xff]
  %v221 = vld [vmem:[%s6] sm:$0x1]
  %v223 = vlaneseq
  %v224 = vshrl.u32 %v223, 7
  %v225 = vsub.s32 0, %v224
  %v226 = vrot.slane %v221, %v225
  %v229 = vsel %vm177, %v215, 0
  %v232 = vsel %vm177, %v216, 0
  %234 = vmatprep.subr.mxu0 0.0
  %235 = vmatpush1.msra.mxu0 %v217
  %236 = vmatprep.subr.mxu0 0.0
  %237 = vmatpush1.msra.mxu0 %v218
  %238 = vmatprep.subr.mxu0 0.0
  %239 = vmatpush1.msra.mxu0 %v219
  %240 = vmatprep.subr.mxu0 0.0
  %241 = vmatpush1.msra.mxu0 %v220
  %242 = vmatprep.subr.mxu0 0.0
  %243 = vmatpush1.msra.mxu0 0.0
  %244 = vmatprep.subr.mxu0 0.0
  %245 = vmatpush1.msra.mxu0 0.0
  %246 = vmatprep.subr.mxu0 0.0
  %247 = vmatpush1.msra.mxu0 0.0
  %248 = vmatprep.subr.mxu0 0.0
  %249 = vmatpush1.msra.mxu0 0.0
  %250 = vmatprep.subr.mxu0 0.0
  %251 = vmatpush1.msra.mxu0 0.0
  %252 = vmatprep.subr.mxu0 0.0
  %253 = vmatpush1.msra.mxu0 0.0
  %254 = vmatprep.subr.mxu0 0.0
  %255 = vmatpush1.msra.mxu0 0.0
  %256 = vmatprep.subr.mxu0 0.0
  %257 = vmatpush1.msra.mxu0 0.0
  %258 = vmatprep.subr.mxu0 0.0
  %259 = vmatpush1.msra.mxu0 0.0
  %260 = vmatprep.subr.mxu0 0.0
  %261 = vmatpush1.msra.mxu0 0.0
  %262 = vmatprep.subr.mxu0 0.0
  %263 = vmatpush1.msra.mxu0 0.0
  %264 = vmatprep.subr.mxu0 0.0
  %265 = vmatpush1.msra.mxu0 0.0
  %266 = vmatprep.subr.mxu0 0.0
  %267 = vmatpush1.msra.mxu0 0.0
  %268 = vmatprep.subr.mxu0 0.0
  %269 = vmatpush1.msra.mxu0 0.0
  %270 = vmatprep.subr.mxu0 0.0
  %271 = vmatpush1.msra.mxu0 0.0
  %272 = vmatprep.subr.mxu0 0.0
  %273 = vmatpush1.msra.mxu0 0.0
  %274 = vmatprep.subr.mxu0 0.0
  %275 = vmatpush1.msra.mxu0 0.0
  %276 = vmatprep.subr.mxu0 0.0
  %277 = vmatpush1.msra.mxu0 0.0
  %278 = vmatprep.subr.mxu0 0.0
  %279 = vmatpush1.msra.mxu0 0.0
  %280 = vmatprep.subr.mxu0 0.0
  %281 = vmatpush1.msra.mxu0 0.0
  %282 = vmatprep.subr.mxu0 0.0
  %283 = vmatpush1.msra.mxu0 0.0
  %284 = vmatprep.subr.mxu0 0.0
  %285 = vmatpush1.msra.mxu0 0.0
  %286 = vmatprep.subr.mxu0 0.0
  %287 = vmatpush1.msra.mxu0 0.0
  %288 = vmatprep.subr.mxu0 0.0
  %289 = vmatpush1.msra.mxu0 0.0
  %290 = vmatprep.subr.mxu0 0.0
  %291 = vmatpush1.msra.mxu0 0.0
  %292 = vmatprep.subr.mxu0 0.0
  %293 = vmatpush1.msra.mxu0 0.0
  %294 = vmatprep.subr.mxu0 0.0
  %295 = vmatpush1.msra.mxu0 0.0
  %296 = vmatprep.subr.mxu0 0.0
  %297 = vmatpush1.msra.mxu0 0.0
  %298 = vmatprep.mubr.f32.mxu0 0.0
  %299 = vmatmul.mubr.f32.gmra.mrb[0].mxu0 %v229
  %v300 = vpop.f32.mrb[0].mxu0
  %v301 = vadd.f32 %v226, %v300
  %v302 = vpop.f32.mrb[0].mxu0
  %303 = vmatprep.mubr.f32.mxu0 0.0
  %304 = vmatmul.mubr.f32.gmra.mrb[0].mxu0 %v232
  %v305 = vpop.f32.mrb[0].mxu0
  %v306 = vadd.f32 %v226, %v305
  %v307 = vpop.f32.mrb[0].mxu0
  %308 = vdwg.mxu0
  %v309 = vld [vmem:[%s7] sm:$0xff]
  %v310 = vld [vmem:[%s7 + $0x8] sm:$0xff]
  %v311 = vld [vmem:[%s7 + $0x10] sm:$0xff]
  %v312 = vld [vmem:[%s7 + $0x18] sm:$0xff]
  %315 = vrot.lane.b32.xlu0 %v301, 96
  %v316 = vpop.permute.xlu0 %315
  %317 = vrot.lane.b32.xlu0 %v306, 96
  %v318 = vpop.permute.xlu0 %317
  %vm319 = vcmask 130048
  %v320 = vsel %vm319, %v301, 0
  %v322 = vsel %vm319, %v306, 0
  %v324 = vsel %vm319, %v316, 0
  %v326 = vsel %vm319, %v318, 0
  %328 = vmatprep.subr.mxu0 0.0
  %329 = vmatpush1.xpose.msra.mxu0 %v324
  %330 = vmatprep.subr.mxu0 0.0
  %331 = vmatpush1.xpose.msra.mxu0 %v326
  %332 = vmatprep.subr.mxu0 0.0
  %333 = vmatpush1.xpose.msra.mxu0 0.0
  %334 = vmatprep.subr.mxu0 0.0
  %335 = vmatpush1.xpose.msra.mxu0 0.0
  %336 = vmatprep.subr.mxu0 0.0
  %337 = vmatpush1.xpose.msra.mxu0 0.0
  %338 = vmatprep.subr.mxu0 0.0
  %339 = vmatpush1.xpose.msra.mxu0 0.0
  %340 = vmatprep.subr.mxu0 0.0
  %341 = vmatpush1.xpose.msra.mxu0 0.0
  %342 = vmatprep.subr.mxu0 0.0
  %343 = vmatpush1.xpose.msra.mxu0 0.0
  %344 = vmatprep.subr.mxu0 0.0
  %345 = vmatpush1.xpose.msra.mxu0 0.0
  %346 = vmatprep.subr.mxu0 0.0
  %347 = vmatpush1.xpose.msra.mxu0 0.0
  %348 = vmatprep.subr.mxu0 0.0
  %349 = vmatpush1.xpose.msra.mxu0 0.0
  %350 = vmatprep.subr.mxu0 0.0
  %351 = vmatpush1.xpose.msra.mxu0 0.0
  %352 = vmatprep.subr.mxu0 0.0
  %353 = vmatpush1.xpose.msra.mxu0 0.0
  %354 = vmatprep.subr.mxu0 0.0
  %355 = vmatpush1.xpose.msra.mxu0 0.0
  %356 = vmatprep.subr.mxu0 0.0
  %357 = vmatpush1.xpose.msra.mxu0 0.0
  %358 = vmatprep.subr.mxu0 0.0
  %359 = vmatpush1.xpose.msra.mxu0 0.0
  %360 = vmatprep.subr.mxu0 0.0
  %361 = vmatpush1.xpose.msra.mxu0 0.0
  %362 = vmatprep.subr.mxu0 0.0
  %363 = vmatpush1.xpose.msra.mxu0 0.0
  %364 = vmatprep.subr.mxu0 0.0
  %365 = vmatpush1.xpose.msra.mxu0 0.0
  %366 = vmatprep.subr.mxu0 0.0
  %367 = vmatpush1.xpose.msra.mxu0 0.0
  %368 = vmatprep.subr.mxu0 0.0
  %369 = vmatpush1.xpose.msra.mxu0 0.0
  %370 = vmatprep.subr.mxu0 0.0
  %371 = vmatpush1.xpose.msra.mxu0 0.0
  %372 = vmatprep.subr.mxu0 0.0
  %373 = vmatpush1.xpose.msra.mxu0 0.0
  %374 = vmatprep.subr.mxu0 0.0
  %375 = vmatpush1.xpose.msra.mxu0 0.0
  %376 = vmatprep.subr.mxu0 0.0
  %377 = vmatpush1.xpose.msra.mxu0 0.0
  %378 = vmatprep.subr.mxu0 0.0
  %379 = vmatpush1.xpose.msra.mxu0 0.0
  %380 = vmatprep.subr.mxu0 0.0
  %381 = vmatpush1.xpose.msra.mxu0 0.0
  %382 = vmatprep.subr.mxu0 0.0
  %383 = vmatpush1.xpose.msra.mxu0 0.0
  %384 = vmatprep.subr.mxu0 0.0
  %385 = vmatpush1.xpose.msra.mxu0 0.0
  %386 = vmatprep.subr.mxu0 0.0
  %387 = vmatpush1.xpose.msra.mxu0 0.0
  %388 = vmatprep.subr.mxu0 0.0
  %389 = vmatpush1.xpose.msra.mxu0 0.0
  %390 = vmatprep.subr.mxu0 0.0
  %391 = vmatpush1.xpose.msra.mxu0 0.0
  %392 = vmatprep.mubr.f32.mxu0 0.0
  %393 = vmatmul.mubr.f32.gmra.mrb[0].mxu0 %v320
  %v394 = vpop.f32.mrb[0].mxu0
  %v395 = vadd.f32 0.0, %v394
  %v396 = vpop.f32.mrb[0].mxu0
  %397 = vmatprep.mubr.f32.mxu0 0.0
  %398 = vmatmul.mubr.f32.gmra.mrb[0].mxu0 %v322
  %v399 = vpop.f32.mrb[0].mxu0
  %v400 = vadd.f32 0.0, %v399
  %v401 = vpop.f32.mrb[0].mxu0
  %402 = vdwg.mxu0
  %v403 = vmul.f32 %v395, 0.25
  %v404 = vmul.f32 %v400, 0.25
  %v405 = vadd.f32 %v403, %v58
  %v406 = vadd.f32 %v404, %v59
  %v407 = vsel %vm319, %v405, -inf
  %408 = vmax.xlane.f32.xlu0 %v407
  %v409 = vpop.xlane.xlu0 %408
  %v410 = vsel %vm319, %v406, -inf
  %411 = vmax.xlane.f32.xlu0 %v410
  %v412 = vpop.xlane.xlu0 %411
  %v413 = vsub.f32 %v405, %v409
  %v414 = vsub.f32 %v406, %v412
  %v415 = vmul.f32 %v413, 1.442695
  %v416 = vpow.pop %v415
  %v417 = vmul.f32 %v414, 1.442695
  %v418 = vpow.pop %v417
  %v419 = vsel %vm319, %v416, 0.0
  %420 = vadd.xlane.f32.xlu0 %v419
  %v421 = vpop.xlane.xlu0 %420
  %v422 = vsel %vm319, %v418, 0.0
  %423 = vadd.xlane.f32.xlu0 %v422
  %v424 = vpop.xlane.xlu0 %423
  %v425 = vrcp.pop %v421
  %v426 = vrcp.pop %v424
  %v427 = vmul.f32 %v416, %v425
  %v428 = vmul.f32 %v418, %v426
  %429 = vrot.lane.b32.xlu0 %v301, 64
  %v430 = vpop.permute.xlu0 %429
  %431 = vrot.lane.b32.xlu0 %v306, 64
  %v432 = vpop.permute.xlu0 %431
  %v436 = vsel %vm319, %v427, 0
  %v439 = vsel %vm319, %v428, 0
  %441 = vmatprep.subr.mxu0 0.0
  %442 = vmatpush1.msra.mxu0 %v430
  %443 = vmatprep.subr.mxu0 0.0
  %444 = vmatpush1.msra.mxu0 %v432
  %445 = vmatprep.subr.mxu0 0.0
  %446 = vmatpush1.msra.mxu0 0.0
  %447 = vmatprep.subr.mxu0 0.0
  %448 = vmatpush1.msra.mxu0 0.0
  %449 = vmatprep.subr.mxu0 0.0
  %450 = vmatpush1.msra.mxu0 0.0
  %451 = vmatprep.subr.mxu0 0.0
  %452 = vmatpush1.msra.mxu0 0.0
  %453 = vmatprep.subr.mxu0 0.0
  %454 = vmatpush1.msra.mxu0 0.0
  %455 = vmatprep.subr.mxu0 0.0
  %456 = vmatpush1.msra.mxu0 0.0
  %457 = vmatprep.subr.mxu0 0.0
  %458 = vmatpush1.msra.mxu0 0.0
  %459 = vmatprep.subr.mxu0 0.0
  %460 = vmatpush1.msra.mxu0 0.0
  %461 = vmatprep.subr.mxu0 0.0
  %462 = vmatpush1.msra.mxu0 0.0
  %463 = vmatprep.subr.mxu0 0.0
  %464 = vmatpush1.msra.mxu0 0.0
  %465 = vmatprep.subr.mxu0 0.0
  %466 = vmatpush1.msra.mxu0 0.0
  %467 = vmatprep.subr.mxu0 0.0
  %468 = vmatpush1.msra.mxu0 0.0
  %469 = vmatprep.subr.mxu0 0.0
  %470 = vmatpush1.msra.mxu0 0.0
  %471 = vmatprep.subr.mxu0 0.0
  %472 = vmatpush1.msra.mxu0 0.0
  %473 = vmatprep.subr.mxu0 0.0
  %474 = vmatpush1.msra.mxu0 0.0
  %475 = vmatprep.subr.mxu0 0.0
  %476 = vmatpush1.msra.mxu0 0.0
  %477 = vmatprep.subr.mxu0 0.0
  %478 = vmatpush1.msra.mxu0 0.0
  %479 = vmatprep.subr.mxu0 0.0
  %480 = vmatpush1.msra.mxu0 0.0
  %481 = vmatprep.subr.mxu0 0.0
  %482 = vmatpush1.msra.mxu0 0.0
  %483 = vmatprep.subr.mxu0 0.0
  %484 = vmatpush1.msra.mxu0 0.0
  %485 = vmatprep.subr.mxu0 0.0
  %486 = vmatpush1.msra.mxu0 0.0
  %487 = vmatprep.subr.mxu0 0.0
  %488 = vmatpush1.msra.mxu0 0.0
  %489 = vmatprep.subr.mxu0 0.0
  %490 = vmatpush1.msra.mxu0 0.0
  %491 = vmatprep.subr.mxu0 0.0
  %492 = vmatpush1.msra.mxu0 0.0
  %493 = vmatprep.subr.mxu0 0.0
  %494 = vmatpush1.msra.mxu0 0.0
  %495 = vmatprep.subr.mxu0 0.0
  %496 = vmatpush1.msra.mxu0 0.0
  %497 = vmatprep.subr.mxu0 0.0
  %498 = vmatpush1.msra.mxu0 0.0
  %499 = vmatprep.subr.mxu0 0.0
  %500 = vmatpush1.msra.mxu0 0.0
  %501 = vmatprep.subr.mxu0 0.0
  %502 = vmatpush1.msra.mxu0 0.0
  %503 = vmatprep.subr.mxu0 0.0
  %504 = vmatpush1.msra.mxu0 0.0
  %505 = vmatprep.mubr.f32.mxu0 0.0
  %506 = vmatmul.mubr.f32.gmra.mrb[0].mxu0 %v436
  %v507 = vpop.f32.mrb[0].mxu0
  %v508 = vadd.f32 0.0, %v507
  %v509 = vpop.f32.mrb[0].mxu0
  %510 = vmatprep.mubr.f32.mxu0 0.0
  %511 = vmatmul.mubr.f32.gmra.mrb[0].mxu0 %v439
  %v512 = vpop.f32.mrb[0].mxu0
  %v513 = vadd.f32 0.0, %v512
  %v514 = vpop.f32.mrb[0].mxu0
  %515 = vdwg.mxu0
  %516 = vrot.lane.b32.xlu0 %v301, 112
  %v517 = vpop.permute.xlu0 %516
  %518 = vrot.lane.b32.xlu0 %v306, 112
  %v519 = vpop.permute.xlu0 %518
  %520 = vrot.lane.b32.xlu0 %v301, 80
  %v521 = vpop.permute.xlu0 %520
  %522 = vrot.lane.b32.xlu0 %v306, 80
  %v523 = vpop.permute.xlu0 %522
  %v524 = vsel %vm319, %v517, 0
  %v526 = vsel %vm319, %v519, 0
  %v528 = vsel %vm319, %v521, 0
  %v530 = vsel %vm319, %v523, 0
  %532 = vmatprep.subr.mxu0 0.0
  %533 = vmatpush1.xpose.msra.mxu0 %v528
  %534 = vmatprep.subr.mxu0 0.0
  %535 = vmatpush1.xpose.msra.mxu0 %v530
  %536 = vmatprep.subr.mxu0 0.0
  %537 = vmatpush1.xpose.msra.mxu0 0.0
  %538 = vmatprep.subr.mxu0 0.0
  %539 = vmatpush1.xpose.msra.mxu0 0.0
  %540 = vmatprep.subr.mxu0 0.0
  %541 = vmatpush1.xpose.msra.mxu0 0.0
  %542 = vmatprep.subr.mxu0 0.0
  %543 = vmatpush1.xpose.msra.mxu0 0.0
  %544 = vmatprep.subr.mxu0 0.0
  %545 = vmatpush1.xpose.msra.mxu0 0.0
  %546 = vmatprep.subr.mxu0 0.0
  %547 = vmatpush1.xpose.msra.mxu0 0.0
  %548 = vmatprep.subr.mxu0 0.0
  %549 = vmatpush1.xpose.msra.mxu0 0.0
  %550 = vmatprep.subr.mxu0 0.0
  %551 = vmatpush1.xpose.msra.mxu0 0.0
  %552 = vmatprep.subr.mxu0 0.0
  %553 = vmatpush1.xpose.msra.mxu0 0.0
  %554 = vmatprep.subr.mxu0 0.0
  %555 = vmatpush1.xpose.msra.mxu0 0.0
  %556 = vmatprep.subr.mxu0 0.0
  %557 = vmatpush1.xpose.msra.mxu0 0.0
  %558 = vmatprep.subr.mxu0 0.0
  %559 = vmatpush1.xpose.msra.mxu0 0.0
  %560 = vmatprep.subr.mxu0 0.0
  %561 = vmatpush1.xpose.msra.mxu0 0.0
  %562 = vmatprep.subr.mxu0 0.0
  %563 = vmatpush1.xpose.msra.mxu0 0.0
  %564 = vmatprep.subr.mxu0 0.0
  %565 = vmatpush1.xpose.msra.mxu0 0.0
  %566 = vmatprep.subr.mxu0 0.0
  %567 = vmatpush1.xpose.msra.mxu0 0.0
  %568 = vmatprep.subr.mxu0 0.0
  %569 = vmatpush1.xpose.msra.mxu0 0.0
  %570 = vmatprep.subr.mxu0 0.0
  %571 = vmatpush1.xpose.msra.mxu0 0.0
  %572 = vmatprep.subr.mxu0 0.0
  %573 = vmatpush1.xpose.msra.mxu0 0.0
  %574 = vmatprep.subr.mxu0 0.0
  %575 = vmatpush1.xpose.msra.mxu0 0.0
  %576 = vmatprep.subr.mxu0 0.0
  %577 = vmatpush1.xpose.msra.mxu0 0.0
  %578 = vmatprep.subr.mxu0 0.0
  %579 = vmatpush1.xpose.msra.mxu0 0.0
  %580 = vmatprep.subr.mxu0 0.0
  %581 = vmatpush1.xpose.msra.mxu0 0.0
  %582 = vmatprep.subr.mxu0 0.0
  %583 = vmatpush1.xpose.msra.mxu0 0.0
  %584 = vmatprep.subr.mxu0 0.0
  %585 = vmatpush1.xpose.msra.mxu0 0.0
  %586 = vmatprep.subr.mxu0 0.0
  %587 = vmatpush1.xpose.msra.mxu0 0.0
  %588 = vmatprep.subr.mxu0 0.0
  %589 = vmatpush1.xpose.msra.mxu0 0.0
  %590 = vmatprep.subr.mxu0 0.0
  %591 = vmatpush1.xpose.msra.mxu0 0.0
  %592 = vmatprep.subr.mxu0 0.0
  %593 = vmatpush1.xpose.msra.mxu0 0.0
  %594 = vmatprep.subr.mxu0 0.0
  %595 = vmatpush1.xpose.msra.mxu0 0.0
  %596 = vmatprep.mubr.f32.mxu0 0.0
  %597 = vmatmul.mubr.f32.gmra.mrb[0].mxu0 %v524
  %v598 = vpop.f32.mrb[0].mxu0
  %v599 = vadd.f32 0.0, %v598
  %v600 = vpop.f32.mrb[0].mxu0
  %601 = vmatprep.mubr.f32.mxu0 0.0
  %602 = vmatmul.mubr.f32.gmra.mrb[0].mxu0 %v526
  %v603 = vpop.f32.mrb[0].mxu0
  %v604 = vadd.f32 0.0, %v603
  %v605 = vpop.f32.mrb[0].mxu0
  %606 = vdwg.mxu0
  %v607 = vmul.f32 %v599, 0.25
  %v608 = vmul.f32 %v604, 0.25
  %v609 = vadd.f32 %v607, %v58
  %v610 = vadd.f32 %v608, %v59
  %v611 = vsel %vm319, %v609, -inf
  %612 = vmax.xlane.f32.xlu0 %v611
  %v613 = vpop.xlane.xlu0 %612
  %v614 = vsel %vm319, %v610, -inf
  %615 = vmax.xlane.f32.xlu0 %v614
  %v616 = vpop.xlane.xlu0 %615
  %v617 = vsub.f32 %v609, %v613
  %v618 = vsub.f32 %v610, %v616
  %v619 = vmul.f32 %v617, 1.442695
  %v620 = vpow.pop %v619
  %v621 = vmul.f32 %v618, 1.442695
  %v622 = vpow.pop %v621
  %v623 = vsel %vm319, %v620, 0.0
  %624 = vadd.xlane.f32.xlu0 %v623
  %v625 = vpop.xlane.xlu0 %624
  %v626 = vsel %vm319, %v622, 0.0
  %627 = vadd.xlane.f32.xlu0 %v626
  %v628 = vpop.xlane.xlu0 %627
  %v629 = vrcp.pop %v625
  %v630 = vrcp.pop %v628
  %v631 = vmul.f32 %v620, %v629
  %v632 = vmul.f32 %v622, %v630
  %633 = vrot.lane.b32.xlu0 %v301, 48
  %v634 = vpop.permute.xlu0 %633
  %635 = vrot.lane.b32.xlu0 %v306, 48
  %v636 = vpop.permute.xlu0 %635
  %v640 = vsel %vm319, %v631, 0
  %v643 = vsel %vm319, %v632, 0
  %645 = vmatprep.subr.mxu0 0.0
  %646 = vmatpush1.msra.mxu0 %v634
  %647 = vmatprep.subr.mxu0 0.0
  %648 = vmatpush1.msra.mxu0 %v636
  %649 = vmatprep.subr.mxu0 0.0
  %650 = vmatpush1.msra.mxu0 0.0
  %651 = vmatprep.subr.mxu0 0.0
  %652 = vmatpush1.msra.mxu0 0.0
  %653 = vmatprep.subr.mxu0 0.0
  %654 = vmatpush1.msra.mxu0 0.0
  %655 = vmatprep.subr.mxu0 0.0
  %656 = vmatpush1.msra.mxu0 0.0
  %657 = vmatprep.subr.mxu0 0.0
  %658 = vmatpush1.msra.mxu0 0.0
  %659 = vmatprep.subr.mxu0 0.0
  %660 = vmatpush1.msra.mxu0 0.0
  %661 = vmatprep.subr.mxu0 0.0
  %662 = vmatpush1.msra.mxu0 0.0
  %663 = vmatprep.subr.mxu0 0.0
  %664 = vmatpush1.msra.mxu0 0.0
  %665 = vmatprep.subr.mxu0 0.0
  %666 = vmatpush1.msra.mxu0 0.0
  %667 = vmatprep.subr.mxu0 0.0
  %668 = vmatpush1.msra.mxu0 0.0
  %669 = vmatprep.subr.mxu0 0.0
  %670 = vmatpush1.msra.mxu0 0.0
  %671 = vmatprep.subr.mxu0 0.0
  %672 = vmatpush1.msra.mxu0 0.0
  %673 = vmatprep.subr.mxu0 0.0
  %674 = vmatpush1.msra.mxu0 0.0
  %675 = vmatprep.subr.mxu0 0.0
  %676 = vmatpush1.msra.mxu0 0.0
  %677 = vmatprep.subr.mxu0 0.0
  %678 = vmatpush1.msra.mxu0 0.0
  %679 = vmatprep.subr.mxu0 0.0
  %680 = vmatpush1.msra.mxu0 0.0
  %681 = vmatprep.subr.mxu0 0.0
  %682 = vmatpush1.msra.mxu0 0.0
  %683 = vmatprep.subr.mxu0 0.0
  %684 = vmatpush1.msra.mxu0 0.0
  %685 = vmatprep.subr.mxu0 0.0
  %686 = vmatpush1.msra.mxu0 0.0
  %687 = vmatprep.subr.mxu0 0.0
  %688 = vmatpush1.msra.mxu0 0.0
  %689 = vmatprep.subr.mxu0 0.0
  %690 = vmatpush1.msra.mxu0 0.0
  %691 = vmatprep.subr.mxu0 0.0
  %692 = vmatpush1.msra.mxu0 0.0
  %693 = vmatprep.subr.mxu0 0.0
  %694 = vmatpush1.msra.mxu0 0.0
  %695 = vmatprep.subr.mxu0 0.0
  %696 = vmatpush1.msra.mxu0 0.0
  %697 = vmatprep.subr.mxu0 0.0
  %698 = vmatpush1.msra.mxu0 0.0
  %699 = vmatprep.subr.mxu0 0.0
  %700 = vmatpush1.msra.mxu0 0.0
  %701 = vmatprep.subr.mxu0 0.0
  %702 = vmatpush1.msra.mxu0 0.0
  %703 = vmatprep.subr.mxu0 0.0
  %704 = vmatpush1.msra.mxu0 0.0
  %705 = vmatprep.subr.mxu0 0.0
  %706 = vmatpush1.msra.mxu0 0.0
  %707 = vmatprep.subr.mxu0 0.0
  %708 = vmatpush1.msra.mxu0 0.0
  %709 = vmatprep.mubr.f32.mxu0 0.0
  %710 = vmatmul.mubr.f32.gmra.mrb[0].mxu0 %v640
  %v711 = vpop.f32.mrb[0].mxu0
  %v712 = vadd.f32 0.0, %v711
  %v713 = vpop.f32.mrb[0].mxu0
  %714 = vmatprep.mubr.f32.mxu0 0.0
  %715 = vmatmul.mubr.f32.gmra.mrb[0].mxu0 %v643
  %v716 = vpop.f32.mrb[0].mxu0
  %v717 = vadd.f32 0.0, %v716
  %v718 = vpop.f32.mrb[0].mxu0
  %719 = vdwg.mxu0
  %v721 = vsel %vm319, %v712, 0
  %v724 = vsel %vm319, %v717, 0
  %726 = vmatprep.subr.mxu0 0.0
  %727 = vmatpush1.msra.mxu0 %v311
  %728 = vmatprep.subr.mxu0 0.0
  %729 = vmatpush1.msra.mxu0 %v312
  %730 = vmatprep.subr.mxu0 0.0
  %731 = vmatpush1.msra.mxu0 0.0
  %732 = vmatprep.subr.mxu0 0.0
  %733 = vmatpush1.msra.mxu0 0.0
  %734 = vmatprep.subr.mxu0 0.0
  %735 = vmatpush1.msra.mxu0 0.0
  %736 = vmatprep.subr.mxu0 0.0
  %737 = vmatpush1.msra.mxu0 0.0
  %738 = vmatprep.subr.mxu0 0.0
  %739 = vmatpush1.msra.mxu0 0.0
  %740 = vmatprep.subr.mxu0 0.0
  %741 = vmatpush1.msra.mxu0 0.0
  %742 = vmatprep.subr.mxu0 0.0
  %743 = vmatpush1.msra.mxu0 0.0
  %744 = vmatprep.subr.mxu0 0.0
  %745 = vmatpush1.msra.mxu0 0.0
  %746 = vmatprep.subr.mxu0 0.0
  %747 = vmatpush1.msra.mxu0 0.0
  %748 = vmatprep.subr.mxu0 0.0
  %749 = vmatpush1.msra.mxu0 0.0
  %750 = vmatprep.subr.mxu0 0.0
  %751 = vmatpush1.msra.mxu0 0.0
  %752 = vmatprep.subr.mxu0 0.0
  %753 = vmatpush1.msra.mxu0 0.0
  %754 = vmatprep.subr.mxu0 0.0
  %755 = vmatpush1.msra.mxu0 0.0
  %756 = vmatprep.subr.mxu0 0.0
  %757 = vmatpush1.msra.mxu0 0.0
  %758 = vmatprep.subr.mxu0 0.0
  %759 = vmatpush1.msra.mxu0 0.0
  %760 = vmatprep.subr.mxu0 0.0
  %761 = vmatpush1.msra.mxu0 0.0
  %762 = vmatprep.subr.mxu0 0.0
  %763 = vmatpush1.msra.mxu0 0.0
  %764 = vmatprep.subr.mxu0 0.0
  %765 = vmatpush1.msra.mxu0 0.0
  %766 = vmatprep.subr.mxu0 0.0
  %767 = vmatpush1.msra.mxu0 0.0
  %768 = vmatprep.subr.mxu0 0.0
  %769 = vmatpush1.msra.mxu0 0.0
  %770 = vmatprep.subr.mxu0 0.0
  %771 = vmatpush1.msra.mxu0 0.0
  %772 = vmatprep.subr.mxu0 0.0
  %773 = vmatpush1.msra.mxu0 0.0
  %774 = vmatprep.subr.mxu0 0.0
  %775 = vmatpush1.msra.mxu0 0.0
  %776 = vmatprep.subr.mxu0 0.0
  %777 = vmatpush1.msra.mxu0 0.0
  %778 = vmatprep.subr.mxu0 0.0
  %779 = vmatpush1.msra.mxu0 0.0
  %780 = vmatprep.subr.mxu0 0.0
  %781 = vmatpush1.msra.mxu0 0.0
  %782 = vmatprep.subr.mxu0 0.0
  %783 = vmatpush1.msra.mxu0 0.0
  %784 = vmatprep.subr.mxu0 0.0
  %785 = vmatpush1.msra.mxu0 0.0
  %786 = vmatprep.subr.mxu0 0.0
  %787 = vmatpush1.msra.mxu0 0.0
  %788 = vmatprep.subr.mxu0 0.0
  %789 = vmatpush1.msra.mxu0 0.0
  %790 = vmatprep.mubr.f32.mxu0 0.0
  %791 = vmatmul.mubr.f32.gmra.mrb[0].mxu0 %v721
  %v792 = vpop.f32.mrb[0].mxu0
  %v793 = vadd.f32 0.0, %v792
  %v794 = vpop.f32.mrb[0].mxu0
  %795 = vmatprep.mubr.f32.mxu0 0.0
  %796 = vmatmul.mubr.f32.gmra.mrb[0].mxu0 %v724
  %v797 = vpop.f32.mrb[0].mxu0
  %v798 = vadd.f32 0.0, %v797
  %v799 = vpop.f32.mrb[0].mxu0
  %800 = vdwg.mxu0
  %v802 = vsel %vm319, %v508, 0
  %v805 = vsel %vm319, %v513, 0
  %807 = vmatprep.subr.mxu0 0.0
  %808 = vmatpush1.msra.mxu0 %v309
  %809 = vmatprep.subr.mxu0 0.0
  %810 = vmatpush1.msra.mxu0 %v310
  %811 = vmatprep.subr.mxu0 0.0
  %812 = vmatpush1.msra.mxu0 0.0
  %813 = vmatprep.subr.mxu0 0.0
  %814 = vmatpush1.msra.mxu0 0.0
  %815 = vmatprep.subr.mxu0 0.0
  %816 = vmatpush1.msra.mxu0 0.0
  %817 = vmatprep.subr.mxu0 0.0
  %818 = vmatpush1.msra.mxu0 0.0
  %819 = vmatprep.subr.mxu0 0.0
  %820 = vmatpush1.msra.mxu0 0.0
  %821 = vmatprep.subr.mxu0 0.0
  %822 = vmatpush1.msra.mxu0 0.0
  %823 = vmatprep.subr.mxu0 0.0
  %824 = vmatpush1.msra.mxu0 0.0
  %825 = vmatprep.subr.mxu0 0.0
  %826 = vmatpush1.msra.mxu0 0.0
  %827 = vmatprep.subr.mxu0 0.0
  %828 = vmatpush1.msra.mxu0 0.0
  %829 = vmatprep.subr.mxu0 0.0
  %830 = vmatpush1.msra.mxu0 0.0
  %831 = vmatprep.subr.mxu0 0.0
  %832 = vmatpush1.msra.mxu0 0.0
  %833 = vmatprep.subr.mxu0 0.0
  %834 = vmatpush1.msra.mxu0 0.0
  %835 = vmatprep.subr.mxu0 0.0
  %836 = vmatpush1.msra.mxu0 0.0
  %837 = vmatprep.subr.mxu0 0.0
  %838 = vmatpush1.msra.mxu0 0.0
  %839 = vmatprep.subr.mxu0 0.0
  %840 = vmatpush1.msra.mxu0 0.0
  %841 = vmatprep.subr.mxu0 0.0
  %842 = vmatpush1.msra.mxu0 0.0
  %843 = vmatprep.subr.mxu0 0.0
  %844 = vmatpush1.msra.mxu0 0.0
  %845 = vmatprep.subr.mxu0 0.0
  %846 = vmatpush1.msra.mxu0 0.0
  %847 = vmatprep.subr.mxu0 0.0
  %848 = vmatpush1.msra.mxu0 0.0
  %849 = vmatprep.subr.mxu0 0.0
  %850 = vmatpush1.msra.mxu0 0.0
  %851 = vmatprep.subr.mxu0 0.0
  %852 = vmatpush1.msra.mxu0 0.0
  %853 = vmatprep.subr.mxu0 0.0
  %854 = vmatpush1.msra.mxu0 0.0
  %855 = vmatprep.subr.mxu0 0.0
  %856 = vmatpush1.msra.mxu0 0.0
  %857 = vmatprep.subr.mxu0 0.0
  %858 = vmatpush1.msra.mxu0 0.0
  %859 = vmatprep.subr.mxu0 0.0
  %860 = vmatpush1.msra.mxu0 0.0
  %861 = vmatprep.subr.mxu0 0.0
  %862 = vmatpush1.msra.mxu0 0.0
  %863 = vmatprep.subr.mxu0 0.0
  %864 = vmatpush1.msra.mxu0 0.0
  %865 = vmatprep.subr.mxu0 0.0
  %866 = vmatpush1.msra.mxu0 0.0
  %867 = vmatprep.subr.mxu0 0.0
  %868 = vmatpush1.msra.mxu0 0.0
  %869 = vmatprep.subr.mxu0 0.0
  %870 = vmatpush1.msra.mxu0 0.0
  %871 = vmatprep.mubr.f32.mxu0 0.0
  %872 = vmatmul.mubr.f32.gmra.mrb[0].mxu0 %v802
  %v873 = vpop.f32.mrb[0].mxu0
  %v874 = vadd.f32 %v793, %v873
  %v875 = vpop.f32.mrb[0].mxu0
  %876 = vmatprep.mubr.f32.mxu0 0.0
  %877 = vmatmul.mubr.f32.gmra.mrb[0].mxu0 %v805
  %v878 = vpop.f32.mrb[0].mxu0
  %v879 = vadd.f32 %v798, %v878
  %v880 = vpop.f32.mrb[0].mxu0
  %881 = vdwg.mxu0
  %v882 = vld [vmem:[%s8] sm:$0x1]
  %v884 = vlaneseq
  %v885 = vshrl.u32 %v884, 7
  %v886 = vsub.s32 0, %v885
  %v887 = vrot.slane %v882, %v886
  %v889 = vadd.f32 %v874, %v887
  %v890 = vadd.f32 %v879, %v887
  %v891 = vadd.f32 %v889, %v215
  %v892 = vadd.f32 %v890, %v216
  %v893 = vsel %vm177, %v891, 0.0
  %894 = vadd.xlane.f32.xlu0 %v893
  %v895 = vpop.xlane.xlu0 %894
  %v896 = vsel %vm177, %v892, 0.0
  %897 = vadd.xlane.f32.xlu0 %v896
  %v898 = vpop.xlane.xlu0 %897
  %v899 = vmul.f32 %v895, %v184
  %v900 = vmul.f32 %v898, %v184
  %v901 = vsub.f32 %v891, %v899
  %v902 = vsub.f32 %v892, %v900
  %v903 = vmul.f32 %v901, %v901
  %v904 = vmul.f32 %v902, %v902
  %v905 = vsel %vm177, %v903, 0.0
  %906 = vadd.xlane.f32.xlu0 %v905
  %v907 = vpop.xlane.xlu0 %906
  %v908 = vsel %vm177, %v904, 0.0
  %909 = vadd.xlane.f32.xlu0 %v908
  %v910 = vpop.xlane.xlu0 %909
  %v911 = vmul.f32 %v907, %v184
  %v912 = vmul.f32 %v910, %v184
  %v913 = vadd.f32 %v911, 1e-12
  %v914 = vadd.f32 %v912, 1e-12
  %v915 = vrsqrt.pop %v913
  %v916 = vrsqrt.pop %v914
  %v917 = vmul.f32 %v901, %v915
  %v918 = vmul.f32 %v902, %v916
  %v919 = vlaneseq
  %v920 = vshrl.u32 %v919, 7
  %v921 = vsub.s32 2, %v920
  %v922 = vrot.slane %v56, %v921
  %v923 = vmul.f32 %v917, %v922
  %v924 = vmul.f32 %v918, %v922
  %v925 = vlaneseq
  %v926 = vshrl.u32 %v925, 7
  %v927 = vsub.s32 3, %v926
  %v928 = vrot.slane %v56, %v927
  %v929 = vadd.f32 %v923, %v928
  %v930 = vadd.f32 %v924, %v928
  %v931 = vld [vmem:[%s9] sm:$0xff]
  %v932 = vld [vmem:[%s9 + $0x8] sm:$0xff]
  %v933 = vld [vmem:[%s9 + $0x10] sm:$0xff]
  %v934 = vld [vmem:[%s9 + $0x18] sm:$0xff]
  %v935 = vld [vmem:[%s10] sm:$0x1]
  %v937 = vlaneseq
  %v938 = vshrl.u32 %v937, 7
  %v939 = vsub.s32 0, %v938
  %v940 = vrot.slane %v935, %v939
  %v943 = vsel %vm177, %v929, 0
  %v946 = vsel %vm177, %v930, 0
  %948 = vmatprep.subr.mxu0 0.0
  %949 = vmatpush1.msra.mxu0 %v931
  %950 = vmatprep.subr.mxu0 0.0
  %951 = vmatpush1.msra.mxu0 %v932
  %952 = vmatprep.subr.mxu0 0.0
  %953 = vmatpush1.msra.mxu0 %v933
  %954 = vmatprep.subr.mxu0 0.0
  %955 = vmatpush1.msra.mxu0 %v934
  %956 = vmatprep.subr.mxu0 0.0
  %957 = vmatpush1.msra.mxu0 0.0
  %958 = vmatprep.subr.mxu0 0.0
  %959 = vmatpush1.msra.mxu0 0.0
  %960 = vmatprep.subr.mxu0 0.0
  %961 = vmatpush1.msra.mxu0 0.0
  %962 = vmatprep.subr.mxu0 0.0
  %963 = vmatpush1.msra.mxu0 0.0
  %964 = vmatprep.subr.mxu0 0.0
  %965 = vmatpush1.msra.mxu0 0.0
  %966 = vmatprep.subr.mxu0 0.0
  %967 = vmatpush1.msra.mxu0 0.0
  %968 = vmatprep.subr.mxu0 0.0
  %969 = vmatpush1.msra.mxu0 0.0
  %970 = vmatprep.subr.mxu0 0.0
  %971 = vmatpush1.msra.mxu0 0.0
  %972 = vmatprep.subr.mxu0 0.0
  %973 = vmatpush1.msra.mxu0 0.0
  %974 = vmatprep.subr.mxu0 0.0
  %975 = vmatpush1.msra.mxu0 0.0
  %976 = vmatprep.subr.mxu0 0.0
  %977 = vmatpush1.msra.mxu0 0.0
  %978 = vmatprep.subr.mxu0 0.0
  %979 = vmatpush1.msra.mxu0 0.0
  %980 = vmatprep.subr.mxu0 0.0
  %981 = vmatpush1.msra.mxu0 0.0
  %982 = vmatprep.subr.mxu0 0.0
  %983 = vmatpush1.msra.mxu0 0.0
  %984 = vmatprep.subr.mxu0 0.0
  %985 = vmatpush1.msra.mxu0 0.0
  %986 = vmatprep.subr.mxu0 0.0
  %987 = vmatpush1.msra.mxu0 0.0
  %988 = vmatprep.subr.mxu0 0.0
  %989 = vmatpush1.msra.mxu0 0.0
  %990 = vmatprep.subr.mxu0 0.0
  %991 = vmatpush1.msra.mxu0 0.0
  %992 = vmatprep.subr.mxu0 0.0
  %993 = vmatpush1.msra.mxu0 0.0
  %994 = vmatprep.subr.mxu0 0.0
  %995 = vmatpush1.msra.mxu0 0.0
  %996 = vmatprep.subr.mxu0 0.0
  %997 = vmatpush1.msra.mxu0 0.0
  %998 = vmatprep.subr.mxu0 0.0
  %999 = vmatpush1.msra.mxu0 0.0
  %1000 = vmatprep.subr.mxu0 0.0
  %1001 = vmatpush1.msra.mxu0 0.0
  %1002 = vmatprep.subr.mxu0 0.0
  %1003 = vmatpush1.msra.mxu0 0.0
  %1004 = vmatprep.subr.mxu0 0.0
  %1005 = vmatpush1.msra.mxu0 0.0
  %1006 = vmatprep.subr.mxu0 0.0
  %1007 = vmatpush1.msra.mxu0 0.0
  %1008 = vmatprep.subr.mxu0 0.0
  %1009 = vmatpush1.msra.mxu0 0.0
  %1010 = vmatprep.subr.mxu0 0.0
  %1011 = vmatpush1.msra.mxu0 0.0
  %1012 = vmatprep.mubr.f32.mxu0 0.0
  %1013 = vmatmul.mubr.f32.gmra.mrb[0].mxu0 %v943
  %v1014 = vpop.f32.mrb[0].mxu0
  %v1015 = vadd.f32 %v940, %v1014
  %v1016 = vpop.f32.mrb[0].mxu0
  %1017 = vmatprep.mubr.f32.mxu0 0.0
  %1018 = vmatmul.mubr.f32.gmra.mrb[0].mxu0 %v946
  %v1019 = vpop.f32.mrb[0].mxu0
  %v1020 = vadd.f32 %v940, %v1019
  %v1021 = vpop.f32.mrb[0].mxu0
  %1022 = vdwg.mxu0
  %v1023 = vmul.f32 %v1015, 0.5
  %v1024 = vmul.f32 %v1020, 0.5
  %v1025 = vmul.f32 %v1015, 0.044715
  %v1026 = vmul.f32 %v1020, 0.044715
  %v1027 = vmul.f32 %v1025, %v1015
  %v1028 = vmul.f32 %v1026, %v1020
  %v1029 = vmul.f32 %v1027, %v1015
  %v1030 = vmul.f32 %v1028, %v1020
  %v1031 = vadd.f32 %v1015, %v1029
  %v1032 = vadd.f32 %v1020, %v1030
  %v1033 = vmul.f32 %v1031, 0.7978846
  %v1034 = vmul.f32 %v1032, 0.7978846
  %v1035 = vtanh.pop %v1033
  %v1036 = vtanh.pop %v1034
  %v1037 = vadd.f32 %v1035, 1.0
  %v1038 = vadd.f32 %v1036, 1.0
  %v1039 = vmul.f32 %v1023, %v1037
  %v1040 = vmul.f32 %v1024, %v1038
  %v1041 = vld [vmem:[%s11] sm:$0xff]
  %v1042 = vld [vmem:[%s11 + $0x8] sm:$0xff]
  %v1043 = vld [vmem:[%s11 + $0x10] sm:$0xff]
  %v1044 = vld [vmem:[%s11 + $0x18] sm:$0xff]
  %v1045 = vld [vmem:[%s11 + $0x20] sm:$0xff]
  %v1046 = vld [vmem:[%s11 + $0x28] sm:$0xff]
  %v1047 = vld [vmem:[%s11 + $0x30] sm:$0xff]
  %v1048 = vld [vmem:[%s11 + $0x38] sm:$0xff]
  %v1049 = vld [vmem:[%s11 + $0x40] sm:$0xff]
  %v1050 = vld [vmem:[%s11 + $0x48] sm:$0xff]
  %v1051 = vld [vmem:[%s11 + $0x50] sm:$0xff]
  %v1052 = vld [vmem:[%s11 + $0x58] sm:$0xff]
  %v1053 = vld [vmem:[%s11 + $0x60] sm:$0xff]
  %v1054 = vld [vmem:[%s11 + $0x68] sm:$0xff]
  %v1055 = vld [vmem:[%s11 + $0x70] sm:$0xff]
  %v1056 = vld [vmem:[%s11 + $0x78] sm:$0xff]
  %v1057 = vld [vmem:[%s12] sm:$0x1]
  %v1059 = vlaneseq
  %v1060 = vshrl.u32 %v1059, 7
  %v1061 = vsub.s32 0, %v1060
  %v1062 = vrot.slane %v1057, %v1061
  %1064 = vmatprep.subr.mxu0 0.0
  %1065 = vmatpush1.msra.mxu0 %v1041
  %1066 = vmatprep.subr.mxu0 0.0
  %1067 = vmatpush1.msra.mxu0 %v1042
  %1068 = vmatprep.subr.mxu0 0.0
  %1069 = vmatpush1.msra.mxu0 %v1043
  %1070 = vmatprep.subr.mxu0 0.0
  %1071 = vmatpush1.msra.mxu0 %v1044
  %1072 = vmatprep.subr.mxu0 0.0
  %1073 = vmatpush1.msra.mxu0 %v1045
  %1074 = vmatprep.subr.mxu0 0.0
  %1075 = vmatpush1.msra.mxu0 %v1046
  %1076 = vmatprep.subr.mxu0 0.0
  %1077 = vmatpush1.msra.mxu0 %v1047
  %1078 = vmatprep.subr.mxu0 0.0
  %1079 = vmatpush1.msra.mxu0 %v1048
  %1080 = vmatprep.subr.mxu0 0.0
  %1081 = vmatpush1.msra.mxu0 %v1049
  %1082 = vmatprep.subr.mxu0 0.0
  %1083 = vmatpush1.msra.mxu0 %v1050
  %1084 = vmatprep.subr.mxu0 0.0
  %1085 = vmatpush1.msra.mxu0 %v1051
  %1086 = vmatprep.subr.mxu0 0.0
  %1087 = vmatpush1.msra.mxu0 %v1052
  %1088 = vmatprep.subr.mxu0 0.0
  %1089 = vmatpush1.msra.mxu0 %v1053
  %1090 = vmatprep.subr.mxu0 0.0
  %1091 = vmatpush1.msra.mxu0 %v1054
  %1092 = vmatprep.subr.mxu0 0.0
  %1093 = vmatpush1.msra.mxu0 %v1055
  %1094 = vmatprep.subr.mxu0 0.0
  %1095 = vmatpush1.msra.mxu0 %v1056
  %1096 = vmatprep.subr.mxu0 0.0
  %1097 = vmatpush1.msra.mxu0 0.0
  %1098 = vmatprep.subr.mxu0 0.0
  %1099 = vmatpush1.msra.mxu0 0.0
  %1100 = vmatprep.subr.mxu0 0.0
  %1101 = vmatpush1.msra.mxu0 0.0
  %1102 = vmatprep.subr.mxu0 0.0
  %1103 = vmatpush1.msra.mxu0 0.0
  %1104 = vmatprep.subr.mxu0 0.0
  %1105 = vmatpush1.msra.mxu0 0.0
  %1106 = vmatprep.subr.mxu0 0.0
  %1107 = vmatpush1.msra.mxu0 0.0
  %1108 = vmatprep.subr.mxu0 0.0
  %1109 = vmatpush1.msra.mxu0 0.0
  %1110 = vmatprep.subr.mxu0 0.0
  %1111 = vmatpush1.msra.mxu0 0.0
  %1112 = vmatprep.subr.mxu0 0.0
  %1113 = vmatpush1.msra.mxu0 0.0
  %1114 = vmatprep.subr.mxu0 0.0
  %1115 = vmatpush1.msra.mxu0 0.0
  %1116 = vmatprep.subr.mxu0 0.0
  %1117 = vmatpush1.msra.mxu0 0.0
  %1118 = vmatprep.subr.mxu0 0.0
  %1119 = vmatpush1.msra.mxu0 0.0
  %1120 = vmatprep.subr.mxu0 0.0
  %1121 = vmatpush1.msra.mxu0 0.0
  %1122 = vmatprep.subr.mxu0 0.0
  %1123 = vmatpush1.msra.mxu0 0.0
  %1124 = vmatprep.subr.mxu0 0.0
  %1125 = vmatpush1.msra.mxu0 0.0
  %1126 = vmatprep.subr.mxu0 0.0
  %1127 = vmatpush1.msra.mxu0 0.0
  %1128 = vmatprep.mubr.f32.mxu0 0.0
  %1129 = vmatmul.mubr.f32.gmra.mrb[0].mxu0 %v1039
  %v1130 = vpop.f32.mrb[0].mxu0
  %v1131 = vadd.f32 %v1062, %v1130
  %v1132 = vpop.f32.mrb[0].mxu0
  %1133 = vmatprep.mubr.f32.mxu0 0.0
  %1134 = vmatmul.mubr.f32.gmra.mrb[0].mxu0 %v1040
  %v1135 = vpop.f32.mrb[0].mxu0
  %v1136 = vadd.f32 %v1062, %v1135
  %v1137 = vpop.f32.mrb[0].mxu0
  %1138 = vdwg.mxu0
  %v1139 = vadd.f32 %v1131, %v929
  %v1140 = vadd.f32 %v1136, %v930
  %v1141 = vsel %vm177, %v1139, 0.0
  %1142 = vadd.xlane.f32.xlu0 %v1141
  %v1143 = vpop.xlane.xlu0 %1142
  %v1144 = vsel %vm177, %v1140, 0.0
  %1145 = vadd.xlane.f32.xlu0 %v1144
  %v1146 = vpop.xlane.xlu0 %1145
  %v1147 = vmul.f32 %v1143, %v184
  %v1148 = vmul.f32 %v1146, %v184
  %v1149 = vsub.f32 %v1139, %v1147
  %v1150 = vsub.f32 %v1140, %v1148
  %v1151 = vmul.f32 %v1149, %v1149
  %v1152 = vmul.f32 %v1150, %v1150
  %v1153 = vsel %vm177, %v1151, 0.0
  %1154 = vadd.xlane.f32.xlu0 %v1153
  %v1155 = vpop.xlane.xlu0 %1154
  %v1156 = vsel %vm177, %v1152, 0.0
  %1157 = vadd.xlane.f32.xlu0 %v1156
  %v1158 = vpop.xlane.xlu0 %1157
  %v1159 = vmul.f32 %v1155, %v184
  %v1160 = vmul.f32 %v1158, %v184
  %v1161 = vadd.f32 %v1159, 1e-12
  %v1162 = vadd.f32 %v1160, 1e-12
  %v1163 = vrsqrt.pop %v1161
  %v1164 = vrsqrt.pop %v1162
  %v1165 = vmul.f32 %v1149, %v1163
  %v1166 = vmul.f32 %v1150, %v1164
  %v1167 = vlaneseq
  %v1168 = vshrl.u32 %v1167, 7
  %v1169 = vsub.s32 4, %v1168
  %v1170 = vrot.slane %v56, %v1169
  %v1171 = vmul.f32 %v1165, %v1170
  %v1172 = vmul.f32 %v1166, %v1170
  %v1173 = vlaneseq
  %v1174 = vshrl.u32 %v1173, 7
  %v1175 = vsub.s32 5, %v1174
  %v1176 = vrot.slane %v56, %v1175
  %v1177 = vadd.f32 %v1171, %v1176
  %v1178 = vadd.f32 %v1172, %v1176
  %s1179 = scalar_lea.vmem %s5, 32
  %v1180 = vld [vmem:[%s1179] sm:$0xff]
  %v1181 = vld [vmem:[%s1179 + $0x8] sm:$0xff]
  %v1182 = vld [vmem:[%s1179 + $0x10] sm:$0xff]
  %v1183 = vld [vmem:[%s1179 + $0x18] sm:$0xff]
  %s1184 = scalar_lea.vmem %s6, 1
  %v1185 = vld [vmem:[%s1184] sm:$0x1]
  %v1187 = vlaneseq
  %v1188 = vshrl.u32 %v1187, 7
  %v1189 = vsub.s32 0, %v1188
  %v1190 = vrot.slane %v1185, %v1189
  %v1193 = vsel %vm177, %v1177, 0
  %v1196 = vsel %vm177, %v1178, 0
  %1198 = vmatprep.subr.mxu0 0.0
  %1199 = vmatpush1.msra.mxu0 %v1180
  %1200 = vmatprep.subr.mxu0 0.0
  %1201 = vmatpush1.msra.mxu0 %v1181
  %1202 = vmatprep.subr.mxu0 0.0
  %1203 = vmatpush1.msra.mxu0 %v1182
  %1204 = vmatprep.subr.mxu0 0.0
  %1205 = vmatpush1.msra.mxu0 %v1183
  %1206 = vmatprep.subr.mxu0 0.0
  %1207 = vmatpush1.msra.mxu0 0.0
  %1208 = vmatprep.subr.mxu0 0.0
  %1209 = vmatpush1.msra.mxu0 0.0
  %1210 = vmatprep.subr.mxu0 0.0
  %1211 = vmatpush1.msra.mxu0 0.0
  %1212 = vmatprep.subr.mxu0 0.0
  %1213 = vmatpush1.msra.mxu0 0.0
  %1214 = vmatprep.subr.mxu0 0.0
  %1215 = vmatpush1.msra.mxu0 0.0
  %1216 = vmatprep.subr.mxu0 0.0
  %1217 = vmatpush1.msra.mxu0 0.0
  %1218 = vmatprep.subr.mxu0 0.0
  %1219 = vmatpush1.msra.mxu0 0.0
  %1220 = vmatprep.subr.mxu0 0.0
  %1221 = vmatpush1.msra.mxu0 0.0
  %1222 = vmatprep.subr.mxu0 0.0
  %1223 = vmatpush1.msra.mxu0 0.0
  %1224 = vmatprep.subr.mxu0 0.0
  %1225 = vmatpush1.msra.mxu0 0.0
  %1226 = vmatprep.subr.mxu0 0.0
  %1227 = vmatpush1.msra.mxu0 0.0
  %1228 = vmatprep.subr.mxu0 0.0
  %1229 = vmatpush1.msra.mxu0 0.0
  %1230 = vmatprep.subr.mxu0 0.0
  %1231 = vmatpush1.msra.mxu0 0.0
  %1232 = vmatprep.subr.mxu0 0.0
  %1233 = vmatpush1.msra.mxu0 0.0
  %1234 = vmatprep.subr.mxu0 0.0
  %1235 = vmatpush1.msra.mxu0 0.0
  %1236 = vmatprep.subr.mxu0 0.0
  %1237 = vmatpush1.msra.mxu0 0.0
  %1238 = vmatprep.subr.mxu0 0.0
  %1239 = vmatpush1.msra.mxu0 0.0
  %1240 = vmatprep.subr.mxu0 0.0
  %1241 = vmatpush1.msra.mxu0 0.0
  %1242 = vmatprep.subr.mxu0 0.0
  %1243 = vmatpush1.msra.mxu0 0.0
  %1244 = vmatprep.subr.mxu0 0.0
  %1245 = vmatpush1.msra.mxu0 0.0
  %1246 = vmatprep.subr.mxu0 0.0
  %1247 = vmatpush1.msra.mxu0 0.0
  %1248 = vmatprep.subr.mxu0 0.0
  %1249 = vmatpush1.msra.mxu0 0.0
  %1250 = vmatprep.subr.mxu0 0.0
  %1251 = vmatpush1.msra.mxu0 0.0
  %1252 = vmatprep.subr.mxu0 0.0
  %1253 = vmatpush1.msra.mxu0 0.0
  %1254 = vmatprep.subr.mxu0 0.0
  %1255 = vmatpush1.msra.mxu0 0.0
  %1256 = vmatprep.subr.mxu0 0.0
  %1257 = vmatpush1.msra.mxu0 0.0
  %1258 = vmatprep.subr.mxu0 0.0
  %1259 = vmatpush1.msra.mxu0 0.0
  %1260 = vmatprep.subr.mxu0 0.0
  %1261 = vmatpush1.msra.mxu0 0.0
  %1262 = vmatprep.mubr.f32.mxu0 0.0
  %1263 = vmatmul.mubr.f32.gmra.mrb[0].mxu0 %v1193
  %v1264 = vpop.f32.mrb[0].mxu0
  %v1265 = vadd.f32 %v1190, %v1264
  %v1266 = vpop.f32.mrb[0].mxu0
  %1267 = vmatprep.mubr.f32.mxu0 0.0
  %1268 = vmatmul.mubr.f32.gmra.mrb[0].mxu0 %v1196
  %v1269 = vpop.f32.mrb[0].mxu0
  %v1270 = vadd.f32 %v1190, %v1269
  %v1271 = vpop.f32.mrb[0].mxu0
  %1272 = vdwg.mxu0
  %s1273 = scalar_lea.vmem %s7, 32
  %v1274 = vld [vmem:[%s1273] sm:$0xff]
  %v1275 = vld [vmem:[%s1273 + $0x8] sm:$0xff]
  %v1276 = vld [vmem:[%s1273 + $0x10] sm:$0xff]
  %v1277 = vld [vmem:[%s1273 + $0x18] sm:$0xff]
  %1280 = vrot.lane.b32.xlu0 %v1265, 96
  %v1281 = vpop.permute.xlu0 %1280
  %1282 = vrot.lane.b32.xlu0 %v1270, 96
  %v1283 = vpop.permute.xlu0 %1282
  %v1284 = vsel %vm319, %v1265, 0
  %v1286 = vsel %vm319, %v1270, 0
  %v1288 = vsel %vm319, %v1281, 0
  %v1290 = vsel %vm319, %v1283, 0
  %1292 = vmatprep.subr.mxu0 0.0
  %1293 = vmatpush1.xpose.msra.mxu0 %v1288
  %1294 = vmatprep.subr.mxu0 0.0
  %1295 = vmatpush1.xpose.msra.mxu0 %v1290
  %1296 = vmatprep.subr.mxu0 0.0
  %1297 = vmatpush1.xpose.msra.mxu0 0.0
  %1298 = vmatprep.subr.mxu0 0.0
  %1299 = vmatpush1.xpose.msra.mxu0 0.0
  %1300 = vmatprep.subr.mxu0 0.0
  %1301 = vmatpush1.xpose.msra.mxu0 0.0
  %1302 = vmatprep.subr.mxu0 0.0
  %1303 = vmatpush1.xpose.msra.mxu0 0.0
  %1304 = vmatprep.subr.mxu0 0.0
  %1305 = vmatpush1.xpose.msra.mxu0 0.0
  %1306 = vmatprep.subr.mxu0 0.0
  %1307 = vmatpush1.xpose.msra.mxu0 0.0
  %1308 = vmatprep.subr.mxu0 0.0
  %1309 = vmatpush1.xpose.msra.mxu0 0.0
  %1310 = vmatprep.subr.mxu0 0.0
  %1311 = vmatpush1.xpose.msra.mxu0 0.0
  %1312 = vmatprep.subr.mxu0 0.0
  %1313 = vmatpush1.xpose.msra.mxu0 0.0
  %1314 = vmatprep.subr.mxu0 0.0
  %1315 = vmatpush1.xpose.msra.mxu0 0.0
  %1316 = vmatprep.subr.mxu0 0.0
  %1317 = vmatpush1.xpose.msra.mxu0 0.0
  %1318 = vmatprep.subr.mxu0 0.0
  %1319 = vmatpush1.xpose.msra.mxu0 0.0
  %1320 = vmatprep.subr.mxu0 0.0
  %1321 = vmatpush1.xpose.msra.mxu0 0.0
  %1322 = vmatprep.subr.mxu0 0.0
  %1323 = vmatpush1.xpose.msra.mxu0 0.0
  %1324 = vmatprep.subr.mxu0 0.0
  %1325 = vmatpush1.xpose.msra.mxu0 0.0
  %1326 = vmatprep.subr.mxu0 0.0
  %1327 = vmatpush1.xpose.msra.mxu0 0.0
  %1328 = vmatprep.subr.mxu0 0.0
  %1329 = vmatpush1.xpose.msra.mxu0 0.0
  %1330 = vmatprep.subr.mxu0 0.0
  %1331 = vmatpush1.xpose.msra.mxu0 0.0
  %1332 = vmatprep.subr.mxu0 0.0
  %1333 = vmatpush1.xpose.msra.mxu0 0.0
  %1334 = vmatprep.subr.mxu0 0.0
  %1335 = vmatpush1.xpose.msra.mxu0 0.0
  %1336 = vmatprep.subr.mxu0 0.0
  %1337 = vmatpush1.xpose.msra.mxu0 0.0
  %1338 = vmatprep.subr.mxu0 0.0
  %1339 = vmatpush1.xpose.msra.mxu0 0.0
  %1340 = vmatprep.subr.mxu0 0.0
  %1341 = vmatpush1.xpose.msra.mxu0 0.0
  %1342 = vmatprep.subr.mxu0 0.0
  %1343 = vmatpush1.xpose.msra.mxu0 0.0
  %1344 = vmatprep.subr.mxu0 0.0
  %1345 = vmatpush1.xpose.msra.mxu0 0.0
  %1346 = vmatprep.subr.mxu0 0.0
  %1347 = vmatpush1.xpose.msra.mxu0 0.0
  %1348 = vmatprep.subr.mxu0 0.0
  %1349 = vmatpush1.xpose.msra.mxu0 0.0
  %1350 = vmatprep.subr.mxu0 0.0
  %1351 = vmatpush1.xpose.msra.mxu0 0.0
  %1352 = vmatprep.subr.mxu0 0.0
  %1353 = vmatpush1.xpose.msra.mxu0 0.0
  %1354 = vmatprep.subr.mxu0 0.0
  %1355 = vmatpush1.xpose.msra.mxu0 0.0
  %1356 = vmatprep.mubr.f32.mxu0 0.0
  %1357 = vmatmul.mubr.f32.gmra.mrb[0].mxu0 %v1284
  %v1358 = vpop.f32.mrb[0].mxu0
  %v1359 = vadd.f32 0.0, %v1358
  %v1360 = vpop.f32.mrb[0].mxu0
  %1361 = vmatprep.mubr.f32.mxu0 0.0
  %1362 = vmatmul.mubr.f32.gmra.mrb[0].mxu0 %v1286
  %v1363 = vpop.f32.mrb[0].mxu0
  %v1364 = vadd.f32 0.0, %v1363
  %v1365 = vpop.f32.mrb[0].mxu0
  %1366 = vdwg.mxu0
  %v1367 = vmul.f32 %v1359, 0.25
  %v1368 = vmul.f32 %v1364, 0.25
  %v1369 = vadd.f32 %v1367, %v58
  %v1370 = vadd.f32 %v1368, %v59
  %v1371 = vsel %vm319, %v1369, -inf
  %1372 = vmax.xlane.f32.xlu0 %v1371
  %v1373 = vpop.xlane.xlu0 %1372
  %v1374 = vsel %vm319, %v1370, -inf
  %1375 = vmax.xlane.f32.xlu0 %v1374
  %v1376 = vpop.xlane.xlu0 %1375
  %v1377 = vsub.f32 %v1369, %v1373
  %v1378 = vsub.f32 %v1370, %v1376
  %v1379 = vmul.f32 %v1377, 1.442695
  %v1380 = vpow.pop %v1379
  %v1381 = vmul.f32 %v1378, 1.442695
  %v1382 = vpow.pop %v1381
  %v1383 = vsel %vm319, %v1380, 0.0
  %1384 = vadd.xlane.f32.xlu0 %v1383
  %v1385 = vpop.xlane.xlu0 %1384
  %v1386 = vsel %vm319, %v1382, 0.0
  %1387 = vadd.xlane.f32.xlu0 %v1386
  %v1388 = vpop.xlane.xlu0 %1387
  %v1389 = vrcp.pop %v1385
  %v1390 = vrcp.pop %v1388
  %v1391 = vmul.f32 %v1380, %v1389
  %v1392 = vmul.f32 %v1382, %v1390
  %1393 = vrot.lane.b32.xlu0 %v1265, 64
  %v1394 = vpop.permute.xlu0 %1393
  %1395 = vrot.lane.b32.xlu0 %v1270, 64
  %v1396 = vpop.permute.xlu0 %1395
  %v1400 = vsel %vm319, %v1391, 0
  %v1403 = vsel %vm319, %v1392, 0
  %1405 = vmatprep.subr.mxu0 0.0
  %1406 = vmatpush1.msra.mxu0 %v1394
  %1407 = vmatprep.subr.mxu0 0.0
  %1408 = vmatpush1.msra.mxu0 %v1396
  %1409 = vmatprep.subr.mxu0 0.0
  %1410 = vmatpush1.msra.mxu0 0.0
  %1411 = vmatprep.subr.mxu0 0.0
  %1412 = vmatpush1.msra.mxu0 0.0
  %1413 = vmatprep.subr.mxu0 0.0
  %1414 = vmatpush1.msra.mxu0 0.0
  %1415 = vmatprep.subr.mxu0 0.0
  %1416 = vmatpush1.msra.mxu0 0.0
  %1417 = vmatprep.subr.mxu0 0.0
  %1418 = vmatpush1.msra.mxu0 0.0
  %1419 = vmatprep.subr.mxu0 0.0
  %1420 = vmatpush1.msra.mxu0 0.0
  %1421 = vmatprep.subr.mxu0 0.0
  %1422 = vmatpush1.msra.mxu0 0.0
  %1423 = vmatprep.subr.mxu0 0.0
  %1424 = vmatpush1.msra.mxu0 0.0
  %1425 = vmatprep.subr.mxu0 0.0
  %1426 = vmatpush1.msra.mxu0 0.0
  %1427 = vmatprep.subr.mxu0 0.0
  %1428 = vmatpush1.msra.mxu0 0.0
  %1429 = vmatprep.subr.mxu0 0.0
  %1430 = vmatpush1.msra.mxu0 0.0
  %1431 = vmatprep.subr.mxu0 0.0
  %1432 = vmatpush1.msra.mxu0 0.0
  %1433 = vmatprep.subr.mxu0 0.0
  %1434 = vmatpush1.msra.mxu0 0.0
  %1435 = vmatprep.subr.mxu0 0.0
  %1436 = vmatpush1.msra.mxu0 0.0
  %1437 = vmatprep.subr.mxu0 0.0
  %1438 = vmatpush1.msra.mxu0 0.0
  %1439 = vmatprep.subr.mxu0 0.0
  %1440 = vmatpush1.msra.mxu0 0.0
  %1441 = vmatprep.subr.mxu0 0.0
  %1442 = vmatpush1.msra.mxu0 0.0
  %1443 = vmatprep.subr.mxu0 0.0
  %1444 = vmatpush1.msra.mxu0 0.0
  %1445 = vmatprep.subr.mxu0 0.0
  %1446 = vmatpush1.msra.mxu0 0.0
  %1447 = vmatprep.subr.mxu0 0.0
  %1448 = vmatpush1.msra.mxu0 0.0
  %1449 = vmatprep.subr.mxu0 0.0
  %1450 = vmatpush1.msra.mxu0 0.0
  %1451 = vmatprep.subr.mxu0 0.0
  %1452 = vmatpush1.msra.mxu0 0.0
  %1453 = vmatprep.subr.mxu0 0.0
  %1454 = vmatpush1.msra.mxu0 0.0
  %1455 = vmatprep.subr.mxu0 0.0
  %1456 = vmatpush1.msra.mxu0 0.0
  %1457 = vmatprep.subr.mxu0 0.0
  %1458 = vmatpush1.msra.mxu0 0.0
  %1459 = vmatprep.subr.mxu0 0.0
  %1460 = vmatpush1.msra.mxu0 0.0
  %1461 = vmatprep.subr.mxu0 0.0
  %1462 = vmatpush1.msra.mxu0 0.0
  %1463 = vmatprep.subr.mxu0 0.0
  %1464 = vmatpush1.msra.mxu0 0.0
  %1465 = vmatprep.subr.mxu0 0.0
  %1466 = vmatpush1.msra.mxu0 0.0
  %1467 = vmatprep.subr.mxu0 0.0
  %1468 = vmatpush1.msra.mxu0 0.0
  %1469 = vmatprep.mubr.f32.mxu0 0.0
  %1470 = vmatmul.mubr.f32.gmra.mrb[0].mxu0 %v1400
  %v1471 = vpop.f32.mrb[0].mxu0
  %v1472 = vadd.f32 0.0, %v1471
  %v1473 = vpop.f32.mrb[0].mxu0
  %1474 = vmatprep.mubr.f32.mxu0 0.0
  %1475 = vmatmul.mubr.f32.gmra.mrb[0].mxu0 %v1403
  %v1476 = vpop.f32.mrb[0].mxu0
  %v1477 = vadd.f32 0.0, %v1476
  %v1478 = vpop.f32.mrb[0].mxu0
  %1479 = vdwg.mxu0
  %1480 = vrot.lane.b32.xlu0 %v1265, 112
  %v1481 = vpop.permute.xlu0 %1480
  %1482 = vrot.lane.b32.xlu0 %v1270, 112
  %v1483 = vpop.permute.xlu0 %1482
  %1484 = vrot.lane.b32.xlu0 %v1265, 80
  %v1485 = vpop.permute.xlu0 %1484
  %1486 = vrot.lane.b32.xlu0 %v1270, 80
  %v1487 = vpop.permute.xlu0 %1486
  %v1488 = vsel %vm319, %v1481, 0
  %v1490 = vsel %vm319, %v1483, 0
  %v1492 = vsel %vm319, %v1485, 0
  %v1494 = vsel %vm319, %v1487, 0
  %1496 = vmatprep.subr.mxu0 0.0
  %1497 = vmatpush1.xpose.msra.mxu0 %v1492
  %1498 = vmatprep.subr.mxu0 0.0
  %1499 = vmatpush1.xpose.msra.mxu0 %v1494
  %1500 = vmatprep.subr.mxu0 0.0
  %1501 = vmatpush1.xpose.msra.mxu0 0.0
  %1502 = vmatprep.subr.mxu0 0.0
  %1503 = vmatpush1.xpose.msra.mxu0 0.0
  %1504 = vmatprep.subr.mxu0 0.0
  %1505 = vmatpush1.xpose.msra.mxu0 0.0
  %1506 = vmatprep.subr.mxu0 0.0
  %1507 = vmatpush1.xpose.msra.mxu0 0.0
  %1508 = vmatprep.subr.mxu0 0.0
  %1509 = vmatpush1.xpose.msra.mxu0 0.0
  %1510 = vmatprep.subr.mxu0 0.0
  %1511 = vmatpush1.xpose.msra.mxu0 0.0
  %1512 = vmatprep.subr.mxu0 0.0
  %1513 = vmatpush1.xpose.msra.mxu0 0.0
  %1514 = vmatprep.subr.mxu0 0.0
  %1515 = vmatpush1.xpose.msra.mxu0 0.0
  %1516 = vmatprep.subr.mxu0 0.0
  %1517 = vmatpush1.xpose.msra.mxu0 0.0
  %1518 = vmatprep.subr.mxu0 0.0
  %1519 = vmatpush1.xpose.msra.mxu0 0.0
  %1520 = vmatprep.subr.mxu0 0.0
  %1521 = vmatpush1.xpose.msra.mxu0 0.0
  %1522 = vmatprep.subr.mxu0 0.0
  %1523 = vmatpush1.xpose.msra.mxu0 0.0
  %1524 = vmatprep.subr.mxu0 0.0
  %1525 = vmatpush1.xpose.msra.mxu0 0.0
  %1526 = vmatprep.subr.mxu0 0.0
  %1527 = vmatpush1.xpose.msra.mxu0 0.0
  %1528 = vmatprep.subr.mxu0 0.0
  %1529 = vmatpush1.xpose.msra.mxu0 0.0
  %1530 = vmatprep.subr.mxu0 0.0
  %1531 = vmatpush1.xpose.msra.mxu0 0.0
  %1532 = vmatprep.subr.mxu0 0.0
  %1533 = vmatpush1.xpose.msra.mxu0 0.0
  %1534 = vmatprep.subr.mxu0 0.0
  %1535 = vmatpush1.xpose.msra.mxu0 0.0
  %1536 = vmatprep.subr.mxu0 0.0
  %1537 = vmatpush1.xpose.msra.mxu0 0.0
  %1538 = vmatprep.subr.mxu0 0.0
  %1539 = vmatpush1.xpose.msra.mxu0 0.0
  %1540 = vmatprep.subr.mxu0 0.0
  %1541 = vmatpush1.xpose.msra.mxu0 0.0
  %1542 = vmatprep.subr.mxu0 0.0
  %1543 = vmatpush1.xpose.msra.mxu0 0.0
  %1544 = vmatprep.subr.mxu0 0.0
  %1545 = vmatpush1.xpose.msra.mxu0 0.0
  %1546 = vmatprep.subr.mxu0 0.0
  %1547 = vmatpush1.xpose.msra.mxu0 0.0
  %1548 = vmatprep.subr.mxu0 0.0
  %1549 = vmatpush1.xpose.msra.mxu0 0.0
  %1550 = vmatprep.subr.mxu0 0.0
  %1551 = vmatpush1.xpose.msra.mxu0 0.0
  %1552 = vmatprep.subr.mxu0 0.0
  %1553 = vmatpush1.xpose.msra.mxu0 0.0
  %1554 = vmatprep.subr.mxu0 0.0
  %1555 = vmatpush1.xpose.msra.mxu0 0.0
  %1556 = vmatprep.subr.mxu0 0.0
  %1557 = vmatpush1.xpose.msra.mxu0 0.0
  %1558 = vmatprep.subr.mxu0 0.0
  %1559 = vmatpush1.xpose.msra.mxu0 0.0
  %1560 = vmatprep.mubr.f32.mxu0 0.0
  %1561 = vmatmul.mubr.f32.gmra.mrb[0].mxu0 %v1488
  %v1562 = vpop.f32.mrb[0].mxu0
  %v1563 = vadd.f32 0.0, %v1562
  %v1564 = vpop.f32.mrb[0].mxu0
  %1565 = vmatprep.mubr.f32.mxu0 0.0
  %1566 = vmatmul.mubr.f32.gmra.mrb[0].mxu0 %v1490
  %v1567 = vpop.f32.mrb[0].mxu0
  %v1568 = vadd.f32 0.0, %v1567
  %v1569 = vpop.f32.mrb[0].mxu0
  %1570 = vdwg.mxu0
  %v1571 = vmul.f32 %v1563, 0.25
  %v1572 = vmul.f32 %v1568, 0.25
  %v1573 = vadd.f32 %v1571, %v58
  %v1574 = vadd.f32 %v1572, %v59
  %v1575 = vsel %vm319, %v1573, -inf
  %1576 = vmax.xlane.f32.xlu0 %v1575
  %v1577 = vpop.xlane.xlu0 %1576
  %v1578 = vsel %vm319, %v1574, -inf
  %1579 = vmax.xlane.f32.xlu0 %v1578
  %v1580 = vpop.xlane.xlu0 %1579
  %v1581 = vsub.f32 %v1573, %v1577
  %v1582 = vsub.f32 %v1574, %v1580
  %v1583 = vmul.f32 %v1581, 1.442695
  %v1584 = vpow.pop %v1583
  %v1585 = vmul.f32 %v1582, 1.442695
  %v1586 = vpow.pop %v1585
  %v1587 = vsel %vm319, %v1584, 0.0
  %1588 = vadd.xlane.f32.xlu0 %v1587
  %v1589 = vpop.xlane.xlu0 %1588
  %v1590 = vsel %vm319, %v1586, 0.0
  %1591 = vadd.xlane.f32.xlu0 %v1590
  %v1592 = vpop.xlane.xlu0 %1591
  %v1593 = vrcp.pop %v1589
  %v1594 = vrcp.pop %v1592
  %v1595 = vmul.f32 %v1584, %v1593
  %v1596 = vmul.f32 %v1586, %v1594
  %1597 = vrot.lane.b32.xlu0 %v1265, 48
  %v1598 = vpop.permute.xlu0 %1597
  %1599 = vrot.lane.b32.xlu0 %v1270, 48
  %v1600 = vpop.permute.xlu0 %1599
  %v1604 = vsel %vm319, %v1595, 0
  %v1607 = vsel %vm319, %v1596, 0
  %1609 = vmatprep.subr.mxu0 0.0
  %1610 = vmatpush1.msra.mxu0 %v1598
  %1611 = vmatprep.subr.mxu0 0.0
  %1612 = vmatpush1.msra.mxu0 %v1600
  %1613 = vmatprep.subr.mxu0 0.0
  %1614 = vmatpush1.msra.mxu0 0.0
  %1615 = vmatprep.subr.mxu0 0.0
  %1616 = vmatpush1.msra.mxu0 0.0
  %1617 = vmatprep.subr.mxu0 0.0
  %1618 = vmatpush1.msra.mxu0 0.0
  %1619 = vmatprep.subr.mxu0 0.0
  %1620 = vmatpush1.msra.mxu0 0.0
  %1621 = vmatprep.subr.mxu0 0.0
  %1622 = vmatpush1.msra.mxu0 0.0
  %1623 = vmatprep.subr.mxu0 0.0
  %1624 = vmatpush1.msra.mxu0 0.0
  %1625 = vmatprep.subr.mxu0 0.0
  %1626 = vmatpush1.msra.mxu0 0.0
  %1627 = vmatprep.subr.mxu0 0.0
  %1628 = vmatpush1.msra.mxu0 0.0
  %1629 = vmatprep.subr.mxu0 0.0
  %1630 = vmatpush1.msra.mxu0 0.0
  %1631 = vmatprep.subr.mxu0 0.0
  %1632 = vmatpush1.msra.mxu0 0.0
  %1633 = vmatprep.subr.mxu0 0.0
  %1634 = vmatpush1.msra.mxu0 0.0
  %1635 = vmatprep.subr.mxu0 0.0
  %1636 = vmatpush1.msra.mxu0 0.0
  %1637 = vmatprep.subr.mxu0 0.0
  %1638 = vmatpush1.msra.mxu0 0.0
  %1639 = vmatprep.subr.mxu0 0.0
  %1640 = vmatpush1.msra.mxu0 0.0
  %1641 = vmatprep.subr.mxu0 0.0
  %1642 = vmatpush1.msra.mxu0 0.0
  %1643 = vmatprep.subr.mxu0 0.0
  %1644 = vmatpush1.msra.mxu0 0.0
  %1645 = vmatprep.subr.mxu0 0.0
  %1646 = vmatpush1.msra.mxu0 0.0
  %1647 = vmatprep.subr.mxu0 0.0
  %1648 = vmatpush1.msra.mxu0 0.0
  %1649 = vmatprep.subr.mxu0 0.0
  %1650 = vmatpush1.msra.mxu0 0.0
  %1651 = vmatprep.subr.mxu0 0.0
  %1652 = vmatpush1.msra.mxu0 0.0
  %1653 = vmatprep.subr.mxu0 0.0
  %1654 = vmatpush1.msra.mxu0 0.0
  %1655 = vmatprep.subr.mxu0 0.0
  %1656 = vmatpush1.msra.mxu0 0.0
  %1657 = vmatprep.subr.mxu0 0.0
  %1658 = vmatpush1.msra.mxu0 0.0
  %1659 = vmatprep.subr.mxu0 0.0
  %1660 = vmatpush1.msra.mxu0 0.0
  %1661 = vmatprep.subr.mxu0 0.0
  %1662 = vmatpush1.msra.mxu0 0.0
  %1663 = vmatprep.subr.mxu0 0.0
  %1664 = vmatpush1.msra.mxu0 0.0
  %1665 = vmatprep.subr.mxu0 0.0
  %1666 = vmatpush1.msra.mxu0 0.0
  %1667 = vmatprep.subr.mxu0 0.0
  %1668 = vmatpush1.msra.mxu0 0.0
  %1669 = vmatprep.subr.mxu0 0.0
  %1670 = vmatpush1.msra.mxu0 0.0
  %1671 = vmatprep.subr.mxu0 0.0
  %1672 = vmatpush1.msra.mxu0 0.0
  %1673 = vmatprep.mubr.f32.mxu0 0.0
  %1674 = vmatmul.mubr.f32.gmra.mrb[0].mxu0 %v1604
  %v1675 = vpop.f32.mrb[0].mxu0
  %v1676 = vadd.f32 0.0, %v1675
  %v1677 = vpop.f32.mrb[0].mxu0
  %1678 = vmatprep.mubr.f32.mxu0 0.0
  %1679 = vmatmul.mubr.f32.gmra.mrb[0].mxu0 %v1607
  %v1680 = vpop.f32.mrb[0].mxu0
  %v1681 = vadd.f32 0.0, %v1680
  %v1682 = vpop.f32.mrb[0].mxu0
  %1683 = vdwg.mxu0
  %v1685 = vsel %vm319, %v1676, 0
  %v1688 = vsel %vm319, %v1681, 0
  %1690 = vmatprep.subr.mxu0 0.0
  %1691 = vmatpush1.msra.mxu0 %v1276
  %1692 = vmatprep.subr.mxu0 0.0
  %1693 = vmatpush1.msra.mxu0 %v1277
  %1694 = vmatprep.subr.mxu0 0.0
  %1695 = vmatpush1.msra.mxu0 0.0
  %1696 = vmatprep.subr.mxu0 0.0
  %1697 = vmatpush1.msra.mxu0 0.0
  %1698 = vmatprep.subr.mxu0 0.0
  %1699 = vmatpush1.msra.mxu0 0.0
  %1700 = vmatprep.subr.mxu0 0.0
  %1701 = vmatpush1.msra.mxu0 0.0
  %1702 = vmatprep.subr.mxu0 0.0
  %1703 = vmatpush1.msra.mxu0 0.0
  %1704 = vmatprep.subr.mxu0 0.0
  %1705 = vmatpush1.msra.mxu0 0.0
  %1706 = vmatprep.subr.mxu0 0.0
  %1707 = vmatpush1.msra.mxu0 0.0
  %1708 = vmatprep.subr.mxu0 0.0
  %1709 = vmatpush1.msra.mxu0 0.0
  %1710 = vmatprep.subr.mxu0 0.0
  %1711 = vmatpush1.msra.mxu0 0.0
  %1712 = vmatprep.subr.mxu0 0.0
  %1713 = vmatpush1.msra.mxu0 0.0
  %1714 = vmatprep.subr.mxu0 0.0
  %1715 = vmatpush1.msra.mxu0 0.0
  %1716 = vmatprep.subr.mxu0 0.0
  %1717 = vmatpush1.msra.mxu0 0.0
  %1718 = vmatprep.subr.mxu0 0.0
  %1719 = vmatpush1.msra.mxu0 0.0
  %1720 = vmatprep.subr.mxu0 0.0
  %1721 = vmatpush1.msra.mxu0 0.0
  %1722 = vmatprep.subr.mxu0 0.0
  %1723 = vmatpush1.msra.mxu0 0.0
  %1724 = vmatprep.subr.mxu0 0.0
  %1725 = vmatpush1.msra.mxu0 0.0
  %1726 = vmatprep.subr.mxu0 0.0
  %1727 = vmatpush1.msra.mxu0 0.0
  %1728 = vmatprep.subr.mxu0 0.0
  %1729 = vmatpush1.msra.mxu0 0.0
  %1730 = vmatprep.subr.mxu0 0.0
  %1731 = vmatpush1.msra.mxu0 0.0
  %1732 = vmatprep.subr.mxu0 0.0
  %1733 = vmatpush1.msra.mxu0 0.0
  %1734 = vmatprep.subr.mxu0 0.0
  %1735 = vmatpush1.msra.mxu0 0.0
  %1736 = vmatprep.subr.mxu0 0.0
  %1737 = vmatpush1.msra.mxu0 0.0
  %1738 = vmatprep.subr.mxu0 0.0
  %1739 = vmatpush1.msra.mxu0 0.0
  %1740 = vmatprep.subr.mxu0 0.0
  %1741 = vmatpush1.msra.mxu0 0.0
  %1742 = vmatprep.subr.mxu0 0.0
  %1743 = vmatpush1.msra.mxu0 0.0
  %1744 = vmatprep.subr.mxu0 0.0
  %1745 = vmatpush1.msra.mxu0 0.0
  %1746 = vmatprep.subr.mxu0 0.0
  %1747 = vmatpush1.msra.mxu0 0.0
  %1748 = vmatprep.subr.mxu0 0.0
  %1749 = vmatpush1.msra.mxu0 0.0
  %1750 = vmatprep.subr.mxu0 0.0
  %1751 = vmatpush1.msra.mxu0 0.0
  %1752 = vmatprep.subr.mxu0 0.0
  %1753 = vmatpush1.msra.mxu0 0.0
  %1754 = vmatprep.mubr.f32.mxu0 0.0
  %1755 = vmatmul.mubr.f32.gmra.mrb[0].mxu0 %v1685
  %v1756 = vpop.f32.mrb[0].mxu0
  %v1757 = vadd.f32 0.0, %v1756
  %v1758 = vpop.f32.mrb[0].mxu0
  %1759 = vmatprep.mubr.f32.mxu0 0.0
  %1760 = vmatmul.mubr.f32.gmra.mrb[0].mxu0 %v1688
  %v1761 = vpop.f32.mrb[0].mxu0
  %v1762 = vadd.f32 0.0, %v1761
  %v1763 = vpop.f32.mrb[0].mxu0
  %1764 = vdwg.mxu0
  %v1766 = vsel %vm319, %v1472, 0
  %v1769 = vsel %vm319, %v1477, 0
  %1771 = vmatprep.subr.mxu0 0.0
  %1772 = vmatpush1.msra.mxu0 %v1274
  %1773 = vmatprep.subr.mxu0 0.0
  %1774 = vmatpush1.msra.mxu0 %v1275
  %1775 = vmatprep.subr.mxu0 0.0
  %1776 = vmatpush1.msra.mxu0 0.0
  %1777 = vmatprep.subr.mxu0 0.0
  %1778 = vmatpush1.msra.mxu0 0.0
  %1779 = vmatprep.subr.mxu0 0.0
  %1780 = vmatpush1.msra.mxu0 0.0
  %1781 = vmatprep.subr.mxu0 0.0
  %1782 = vmatpush1.msra.mxu0 0.0
  %1783 = vmatprep.subr.mxu0 0.0
  %1784 = vmatpush1.msra.mxu0 0.0
  %1785 = vmatprep.subr.mxu0 0.0
  %1786 = vmatpush1.msra.mxu0 0.0
  %1787 = vmatprep.subr.mxu0 0.0
  %1788 = vmatpush1.msra.mxu0 0.0
  %1789 = vmatprep.subr.mxu0 0.0
  %1790 = vmatpush1.msra.mxu0 0.0
  %1791 = vmatprep.subr.mxu0 0.0
  %1792 = vmatpush1.msra.mxu0 0.0
  %1793 = vmatprep.subr.mxu0 0.0
  %1794 = vmatpush1.msra.mxu0 0.0
  %1795 = vmatprep.subr.mxu0 0.0
  %1796 = vmatpush1.msra.mxu0 0.0
  %1797 = vmatprep.subr.mxu0 0.0
  %1798 = vmatpush1.msra.mxu0 0.0
  %1799 = vmatprep.subr.mxu0 0.0
  %1800 = vmatpush1.msra.mxu0 0.0
  %1801 = vmatprep.subr.mxu0 0.0
  %1802 = vmatpush1.msra.mxu0 0.0
  %1803 = vmatprep.subr.mxu0 0.0
  %1804 = vmatpush1.msra.mxu0 0.0
  %1805 = vmatprep.subr.mxu0 0.0
  %1806 = vmatpush1.msra.mxu0 0.0
  %1807 = vmatprep.subr.mxu0 0.0
  %1808 = vmatpush1.msra.mxu0 0.0
  %1809 = vmatprep.subr.mxu0 0.0
  %1810 = vmatpush1.msra.mxu0 0.0
  %1811 = vmatprep.subr.mxu0 0.0
  %1812 = vmatpush1.msra.mxu0 0.0
  %1813 = vmatprep.subr.mxu0 0.0
  %1814 = vmatpush1.msra.mxu0 0.0
  %1815 = vmatprep.subr.mxu0 0.0
  %1816 = vmatpush1.msra.mxu0 0.0
  %1817 = vmatprep.subr.mxu0 0.0
  %1818 = vmatpush1.msra.mxu0 0.0
  %1819 = vmatprep.subr.mxu0 0.0
  %1820 = vmatpush1.msra.mxu0 0.0
  %1821 = vmatprep.subr.mxu0 0.0
  %1822 = vmatpush1.msra.mxu0 0.0
  %1823 = vmatprep.subr.mxu0 0.0
  %1824 = vmatpush1.msra.mxu0 0.0
  %1825 = vmatprep.subr.mxu0 0.0
  %1826 = vmatpush1.msra.mxu0 0.0
  %1827 = vmatprep.subr.mxu0 0.0
  %1828 = vmatpush1.msra.mxu0 0.0
  %1829 = vmatprep.subr.mxu0 0.0
  %1830 = vmatpush1.msra.mxu0 0.0
  %1831 = vmatprep.subr.mxu0 0.0
  %1832 = vmatpush1.msra.mxu0 0.0
  %1833 = vmatprep.subr.mxu0 0.0
  %1834 = vmatpush1.msra.mxu0 0.0
  %1835 = vmatprep.mubr.f32.mxu0 0.0
  %1836 = vmatmul.mubr.f32.gmra.mrb[0].mxu0 %v1766
  %v1837 = vpop.f32.mrb[0].mxu0
  %v1838 = vadd.f32 %v1757, %v1837
  %v1839 = vpop.f32.mrb[0].mxu0
  %1840 = vmatprep.mubr.f32.mxu0 0.0
  %1841 = vmatmul.mubr.f32.gmra.mrb[0].mxu0 %v1769
  %v1842 = vpop.f32.mrb[0].mxu0
  %v1843 = vadd.f32 %v1762, %v1842
  %v1844 = vpop.f32.mrb[0].mxu0
  %1845 = vdwg.mxu0
  %s1846 = scalar_lea.vmem %s8, 1
  %v1847 = vld [vmem:[%s1846] sm:$0x1]
  %v1849 = vlaneseq
  %v1850 = vshrl.u32 %v1849, 7
  %v1851 = vsub.s32 0, %v1850
  %v1852 = vrot.slane %v1847, %v1851
  %v1854 = vadd.f32 %v1838, %v1852
  %v1855 = vadd.f32 %v1843, %v1852
  %v1856 = vadd.f32 %v1854, %v1177
  %v1857 = vadd.f32 %v1855, %v1178
  %v1858 = vsel %vm177, %v1856, 0.0
  %1859 = vadd.xlane.f32.xlu0 %v1858
  %v1860 = vpop.xlane.xlu0 %1859
  %v1861 = vsel %vm177, %v1857, 0.0
  %1862 = vadd.xlane.f32.xlu0 %v1861
  %v1863 = vpop.xlane.xlu0 %1862
  %v1864 = vmul.f32 %v1860, %v184
  %v1865 = vmul.f32 %v1863, %v184
  %v1866 = vsub.f32 %v1856, %v1864
  %v1867 = vsub.f32 %v1857, %v1865
  %v1868 = vmul.f32 %v1866, %v1866
  %v1869 = vmul.f32 %v1867, %v1867
  %v1870 = vsel %vm177, %v1868, 0.0
  %1871 = vadd.xlane.f32.xlu0 %v1870
  %v1872 = vpop.xlane.xlu0 %1871
  %v1873 = vsel %vm177, %v1869, 0.0
  %1874 = vadd.xlane.f32.xlu0 %v1873
  %v1875 = vpop.xlane.xlu0 %1874
  %v1876 = vmul.f32 %v1872, %v184
  %v1877 = vmul.f32 %v1875, %v184
  %v1878 = vadd.f32 %v1876, 1e-12
  %v1879 = vadd.f32 %v1877, 1e-12
  %v1880 = vrsqrt.pop %v1878
  %v1881 = vrsqrt.pop %v1879
  %v1882 = vmul.f32 %v1866, %v1880
  %v1883 = vmul.f32 %v1867, %v1881
  %v1884 = vlaneseq
  %v1885 = vshrl.u32 %v1884, 7
  %v1886 = vsub.s32 6, %v1885
  %v1887 = vrot.slane %v56, %v1886
  %v1888 = vmul.f32 %v1882, %v1887
  %v1889 = vmul.f32 %v1883, %v1887
  %v1890 = vlaneseq
  %v1891 = vshrl.u32 %v1890, 7
  %v1892 = vsub.s32 7, %v1891
  %v1893 = vrot.slane %v56, %v1892
  %v1894 = vadd.f32 %v1888, %v1893
  %v1895 = vadd.f32 %v1889, %v1893
  %s1896 = scalar_lea.vmem %s9, 32
  %v1897 = vld [vmem:[%s1896] sm:$0xff]
  %v1898 = vld [vmem:[%s1896 + $0x8] sm:$0xff]
  %v1899 = vld [vmem:[%s1896 + $0x10] sm:$0xff]
  %v1900 = vld [vmem:[%s1896 + $0x18] sm:$0xff]
  %s1901 = scalar_lea.vmem %s10, 1
  %v1902 = vld [vmem:[%s1901] sm:$0x1]
  %v1904 = vlaneseq
  %v1905 = vshrl.u32 %v1904, 7
  %v1906 = vsub.s32 0, %v1905
  %v1907 = vrot.slane %v1902, %v1906
  %v1910 = vsel %vm177, %v1894, 0
  %v1913 = vsel %vm177, %v1895, 0
  %1915 = vmatprep.subr.mxu0 0.0
  %1916 = vmatpush1.msra.mxu0 %v1897
  %1917 = vmatprep.subr.mxu0 0.0
  %1918 = vmatpush1.msra.mxu0 %v1898
  %1919 = vmatprep.subr.mxu0 0.0
  %1920 = vmatpush1.msra.mxu0 %v1899
  %1921 = vmatprep.subr.mxu0 0.0
  %1922 = vmatpush1.msra.mxu0 %v1900
  %1923 = vmatprep.subr.mxu0 0.0
  %1924 = vmatpush1.msra.mxu0 0.0
  %1925 = vmatprep.subr.mxu0 0.0
  %1926 = vmatpush1.msra.mxu0 0.0
  %1927 = vmatprep.subr.mxu0 0.0
  %1928 = vmatpush1.msra.mxu0 0.0
  %1929 = vmatprep.subr.mxu0 0.0
  %1930 = vmatpush1.msra.mxu0 0.0
  %1931 = vmatprep.subr.mxu0 0.0
  %1932 = vmatpush1.msra.mxu0 0.0
  %1933 = vmatprep.subr.mxu0 0.0
  %1934 = vmatpush1.msra.mxu0 0.0
  %1935 = vmatprep.subr.mxu0 0.0
  %1936 = vmatpush1.msra.mxu0 0.0
  %1937 = vmatprep.subr.mxu0 0.0
  %1938 = vmatpush1.msra.mxu0 0.0
  %1939 = vmatprep.subr.mxu0 0.0
  %1940 = vmatpush1.msra.mxu0 0.0
  %1941 = vmatprep.subr.mxu0 0.0
  %1942 = vmatpush1.msra.mxu0 0.0
  %1943 = vmatprep.subr.mxu0 0.0
  %1944 = vmatpush1.msra.mxu0 0.0
  %1945 = vmatprep.subr.mxu0 0.0
  %1946 = vmatpush1.msra.mxu0 0.0
  %1947 = vmatprep.subr.mxu0 0.0
  %1948 = vmatpush1.msra.mxu0 0.0
  %1949 = vmatprep.subr.mxu0 0.0
  %1950 = vmatpush1.msra.mxu0 0.0
  %1951 = vmatprep.subr.mxu0 0.0
  %1952 = vmatpush1.msra.mxu0 0.0
  %1953 = vmatprep.subr.mxu0 0.0
  %1954 = vmatpush1.msra.mxu0 0.0
  %1955 = vmatprep.subr.mxu0 0.0
  %1956 = vmatpush1.msra.mxu0 0.0
  %1957 = vmatprep.subr.mxu0 0.0
  %1958 = vmatpush1.msra.mxu0 0.0
  %1959 = vmatprep.subr.mxu0 0.0
  %1960 = vmatpush1.msra.mxu0 0.0
  %1961 = vmatprep.subr.mxu0 0.0
  %1962 = vmatpush1.msra.mxu0 0.0
  %1963 = vmatprep.subr.mxu0 0.0
  %1964 = vmatpush1.msra.mxu0 0.0
  %1965 = vmatprep.subr.mxu0 0.0
  %1966 = vmatpush1.msra.mxu0 0.0
  %1967 = vmatprep.subr.mxu0 0.0
  %1968 = vmatpush1.msra.mxu0 0.0
  %1969 = vmatprep.subr.mxu0 0.0
  %1970 = vmatpush1.msra.mxu0 0.0
  %1971 = vmatprep.subr.mxu0 0.0
  %1972 = vmatpush1.msra.mxu0 0.0
  %1973 = vmatprep.subr.mxu0 0.0
  %1974 = vmatpush1.msra.mxu0 0.0
  %1975 = vmatprep.subr.mxu0 0.0
  %1976 = vmatpush1.msra.mxu0 0.0
  %1977 = vmatprep.subr.mxu0 0.0
  %1978 = vmatpush1.msra.mxu0 0.0
  %1979 = vmatprep.mubr.f32.mxu0 0.0
  %1980 = vmatmul.mubr.f32.gmra.mrb[0].mxu0 %v1910
  %v1981 = vpop.f32.mrb[0].mxu0
  %v1982 = vadd.f32 %v1907, %v1981
  %v1983 = vpop.f32.mrb[0].mxu0
  %1984 = vmatprep.mubr.f32.mxu0 0.0
  %1985 = vmatmul.mubr.f32.gmra.mrb[0].mxu0 %v1913
  %v1986 = vpop.f32.mrb[0].mxu0
  %v1987 = vadd.f32 %v1907, %v1986
  %v1988 = vpop.f32.mrb[0].mxu0
  %1989 = vdwg.mxu0
  %v1990 = vmul.f32 %v1982, 0.5
  %v1991 = vmul.f32 %v1987, 0.5
  %v1992 = vmul.f32 %v1982, 0.044715
  %v1993 = vmul.f32 %v1987, 0.044715
  %v1994 = vmul.f32 %v1992, %v1982
  %v1995 = vmul.f32 %v1993, %v1987
  %v1996 = vmul.f32 %v1994, %v1982
  %v1997 = vmul.f32 %v1995, %v1987
  %v1998 = vadd.f32 %v1982, %v1996
  %v1999 = vadd.f32 %v1987, %v1997
  %v2000 = vmul.f32 %v1998, 0.7978846
  %v2001 = vmul.f32 %v1999, 0.7978846
  %v2002 = vtanh.pop %v2000
  %v2003 = vtanh.pop %v2001
  %v2004 = vadd.f32 %v2002, 1.0
  %v2005 = vadd.f32 %v2003, 1.0
  %v2006 = vmul.f32 %v1990, %v2004
  %v2007 = vmul.f32 %v1991, %v2005
  %s2008 = scalar_lea.vmem %s11, 128
  %v2009 = vld [vmem:[%s2008] sm:$0xff]
  %v2010 = vld [vmem:[%s2008 + $0x8] sm:$0xff]
  %v2011 = vld [vmem:[%s2008 + $0x10] sm:$0xff]
  %v2012 = vld [vmem:[%s2008 + $0x18] sm:$0xff]
  %v2013 = vld [vmem:[%s2008 + $0x20] sm:$0xff]
  %v2014 = vld [vmem:[%s2008 + $0x28] sm:$0xff]
  %v2015 = vld [vmem:[%s2008 + $0x30] sm:$0xff]
  %v2016 = vld [vmem:[%s2008 + $0x38] sm:$0xff]
  %v2017 = vld [vmem:[%s2008 + $0x40] sm:$0xff]
  %v2018 = vld [vmem:[%s2008 + $0x48] sm:$0xff]
  %v2019 = vld [vmem:[%s2008 + $0x50] sm:$0xff]
  %v2020 = vld [vmem:[%s2008 + $0x58] sm:$0xff]
  %v2021 = vld [vmem:[%s2008 + $0x60] sm:$0xff]
  %v2022 = vld [vmem:[%s2008 + $0x68] sm:$0xff]
  %v2023 = vld [vmem:[%s2008 + $0x70] sm:$0xff]
  %v2024 = vld [vmem:[%s2008 + $0x78] sm:$0xff]
  %s2025 = scalar_lea.vmem %s12, 1
  %v2026 = vld [vmem:[%s2025] sm:$0x1]
  %v2028 = vlaneseq
  %v2029 = vshrl.u32 %v2028, 7
  %v2030 = vsub.s32 0, %v2029
  %v2031 = vrot.slane %v2026, %v2030
  %2033 = vmatprep.subr.mxu0 0.0
  %2034 = vmatpush1.msra.mxu0 %v2009
  %2035 = vmatprep.subr.mxu0 0.0
  %2036 = vmatpush1.msra.mxu0 %v2010
  %2037 = vmatprep.subr.mxu0 0.0
  %2038 = vmatpush1.msra.mxu0 %v2011
  %2039 = vmatprep.subr.mxu0 0.0
  %2040 = vmatpush1.msra.mxu0 %v2012
  %2041 = vmatprep.subr.mxu0 0.0
  %2042 = vmatpush1.msra.mxu0 %v2013
  %2043 = vmatprep.subr.mxu0 0.0
  %2044 = vmatpush1.msra.mxu0 %v2014
  %2045 = vmatprep.subr.mxu0 0.0
  %2046 = vmatpush1.msra.mxu0 %v2015
  %2047 = vmatprep.subr.mxu0 0.0
  %2048 = vmatpush1.msra.mxu0 %v2016
  %2049 = vmatprep.subr.mxu0 0.0
  %2050 = vmatpush1.msra.mxu0 %v2017
  %2051 = vmatprep.subr.mxu0 0.0
  %2052 = vmatpush1.msra.mxu0 %v2018
  %2053 = vmatprep.subr.mxu0 0.0
  %2054 = vmatpush1.msra.mxu0 %v2019
  %2055 = vmatprep.subr.mxu0 0.0
  %2056 = vmatpush1.msra.mxu0 %v2020
  %2057 = vmatprep.subr.mxu0 0.0
  %2058 = vmatpush1.msra.mxu0 %v2021
  %2059 = vmatprep.subr.mxu0 0.0
  %2060 = vmatpush1.msra.mxu0 %v2022
  %2061 = vmatprep.subr.mxu0 0.0
  %2062 = vmatpush1.msra.mxu0 %v2023
  %2063 = vmatprep.subr.mxu0 0.0
  %2064 = vmatpush1.msra.mxu0 %v2024
  %2065 = vmatprep.subr.mxu0 0.0
  %2066 = vmatpush1.msra.mxu0 0.0
  %2067 = vmatprep.subr.mxu0 0.0
  %2068 = vmatpush1.msra.mxu0 0.0
  %2069 = vmatprep.subr.mxu0 0.0
  %2070 = vmatpush1.msra.mxu0 0.0
  %2071 = vmatprep.subr.mxu0 0.0
  %2072 = vmatpush1.msra.mxu0 0.0
  %2073 = vmatprep.subr.mxu0 0.0
  %2074 = vmatpush1.msra.mxu0 0.0
  %2075 = vmatprep.subr.mxu0 0.0
  %2076 = vmatpush1.msra.mxu0 0.0
  %2077 = vmatprep.subr.mxu0 0.0
  %2078 = vmatpush1.msra.mxu0 0.0
  %2079 = vmatprep.subr.mxu0 0.0
  %2080 = vmatpush1.msra.mxu0 0.0
  %2081 = vmatprep.subr.mxu0 0.0
  %2082 = vmatpush1.msra.mxu0 0.0
  %2083 = vmatprep.subr.mxu0 0.0
  %2084 = vmatpush1.msra.mxu0 0.0
  %2085 = vmatprep.subr.mxu0 0.0
  %2086 = vmatpush1.msra.mxu0 0.0
  %2087 = vmatprep.subr.mxu0 0.0
  %2088 = vmatpush1.msra.mxu0 0.0
  %2089 = vmatprep.subr.mxu0 0.0
  %2090 = vmatpush1.msra.mxu0 0.0
  %2091 = vmatprep.subr.mxu0 0.0
  %2092 = vmatpush1.msra.mxu0 0.0
  %2093 = vmatprep.subr.mxu0 0.0
  %2094 = vmatpush1.msra.mxu0 0.0
  %2095 = vmatprep.subr.mxu0 0.0
  %2096 = vmatpush1.msra.mxu0 0.0
  %2097 = vmatprep.mubr.f32.mxu0 0.0
  %2098 = vmatmul.mubr.f32.gmra.mrb[0].mxu0 %v2006
  %v2099 = vpop.f32.mrb[0].mxu0
  %v2100 = vadd.f32 %v2031, %v2099
  %v2101 = vpop.f32.mrb[0].mxu0
  %2102 = vmatprep.mubr.f32.mxu0 0.0
  %2103 = vmatmul.mubr.f32.gmra.mrb[0].mxu0 %v2007
  %v2104 = vpop.f32.mrb[0].mxu0
  %v2105 = vadd.f32 %v2031, %v2104
  %v2106 = vpop.f32.mrb[0].mxu0
  %2107 = vdwg.mxu0
  %v2108 = vadd.f32 %v2100, %v1894
  %v2109 = vadd.f32 %v2105, %v1895
  %v2110 = vsel %vm177, %v2108, 0.0
  %2111 = vadd.xlane.f32.xlu0 %v2110
  %v2112 = vpop.xlane.xlu0 %2111
  %v2113 = vsel %vm177, %v2109, 0.0
  %2114 = vadd.xlane.f32.xlu0 %v2113
  %v2115 = vpop.xlane.xlu0 %2114
  %v2116 = vmul.f32 %v2112, %v184
  %v2117 = vmul.f32 %v2115, %v184
  %v2118 = vsub.f32 %v2108, %v2116
  %v2119 = vsub.f32 %v2109, %v2117
  %v2120 = vmul.f32 %v2118, %v2118
  %v2121 = vmul.f32 %v2119, %v2119
  %v2122 = vsel %vm177, %v2120, 0.0
  %2123 = vadd.xlane.f32.xlu0 %v2122
  %v2124 = vpop.xlane.xlu0 %2123
  %v2125 = vsel %vm177, %v2121, 0.0
  %2126 = vadd.xlane.f32.xlu0 %v2125
  %v2127 = vpop.xlane.xlu0 %2126
  %v2128 = vmul.f32 %v2124, %v184
  %v2129 = vmul.f32 %v2127, %v184
  %v2130 = vadd.f32 %v2128, 1e-12
  %v2131 = vadd.f32 %v2129, 1e-12
  %v2132 = vrsqrt.pop %v2130
  %v2133 = vrsqrt.pop %v2131
  %v2134 = vmul.f32 %v2118, %v2132
  %v2135 = vmul.f32 %v2119, %v2133
  %v2136 = vlaneseq
  %v2137 = vshrl.u32 %v2136, 7
  %v2138 = vsub.s32 0, %v2137
  %v2139 = vrot.slane %v57, %v2138
  %v2140 = vmul.f32 %v2134, %v2139
  %v2141 = vmul.f32 %v2135, %v2139
  %v2142 = vlaneseq
  %v2143 = vshrl.u32 %v2142, 7
  %v2144 = vsub.s32 1, %v2143
  %v2145 = vrot.slane %v57, %v2144
  %v2146 = vadd.f32 %v2140, %v2145
  %v2147 = vadd.f32 %v2141, %v2145
  %v2148 = vlaneseq
  %v2149 = vshrl.u32 %v2148, 7
  %v2150 = vmul.u32 %v2149, 8
  %vm2151 = vcmp.eq.s32.totalorder %v2150, %v63
  %v2152 = vsel %vm2151, 1, 0
  %v2153 = vcvt.s32.f32 %v2152
  %v2155 = vsel %vm319, %v2153, 0
  %2157 = vmatprep.subr.mxu0 0.0
  %2158 = vmatpush1.msra.mxu0 %v2146
  %2159 = vmatprep.subr.mxu0 0.0
  %2160 = vmatpush1.msra.mxu0 %v2147
  %2161 = vmatprep.subr.mxu0 0.0
  %2162 = vmatpush1.msra.mxu0 0.0
  %2163 = vmatprep.subr.mxu0 0.0
  %2164 = vmatpush1.msra.mxu0 0.0
  %2165 = vmatprep.subr.mxu0 0.0
  %2166 = vmatpush1.msra.mxu0 0.0
  %2167 = vmatprep.subr.mxu0 0.0
  %2168 = vmatpush1.msra.mxu0 0.0
  %2169 = vmatprep.subr.mxu0 0.0
  %2170 = vmatpush1.msra.mxu0 0.0
  %2171 = vmatprep.subr.mxu0 0.0
  %2172 = vmatpush1.msra.mxu0 0.0
  %2173 = vmatprep.subr.mxu0 0.0
  %2174 = vmatpush1.msra.mxu0 0.0
  %2175 = vmatprep.subr.mxu0 0.0
  %2176 = vmatpush1.msra.mxu0 0.0
  %2177 = vmatprep.subr.mxu0 0.0
  %2178 = vmatpush1.msra.mxu0 0.0
  %2179 = vmatprep.subr.mxu0 0.0
  %2180 = vmatpush1.msra.mxu0 0.0
  %2181 = vmatprep.subr.mxu0 0.0
  %2182 = vmatpush1.msra.mxu0 0.0
  %2183 = vmatprep.subr.mxu0 0.0
  %2184 = vmatpush1.msra.mxu0 0.0
  %2185 = vmatprep.subr.mxu0 0.0
  %2186 = vmatpush1.msra.mxu0 0.0
  %2187 = vmatprep.subr.mxu0 0.0
  %2188 = vmatpush1.msra.mxu0 0.0
  %2189 = vmatprep.subr.mxu0 0.0
  %2190 = vmatpush1.msra.mxu0 0.0
  %2191 = vmatprep.subr.mxu0 0.0
  %2192 = vmatpush1.msra.mxu0 0.0
  %2193 = vmatprep.subr.mxu0 0.0
  %2194 = vmatpush1.msra.mxu0 0.0
  %2195 = vmatprep.subr.mxu0 0.0
  %2196 = vmatpush1.msra.mxu0 0.0
  %2197 = vmatprep.subr.mxu0 0.0
  %2198 = vmatpush1.msra.mxu0 0.0
  %2199 = vmatprep.subr.mxu0 0.0
  %2200 = vmatpush1.msra.mxu0 0.0
  %2201 = vmatprep.subr.mxu0 0.0
  %2202 = vmatpush1.msra.mxu0 0.0
  %2203 = vmatprep.subr.mxu0 0.0
  %2204 = vmatpush1.msra.mxu0 0.0
  %2205 = vmatprep.subr.mxu0 0.0
  %2206 = vmatpush1.msra.mxu0 0.0
  %2207 = vmatprep.subr.mxu0 0.0
  %2208 = vmatpush1.msra.mxu0 0.0
  %2209 = vmatprep.subr.mxu0 0.0
  %2210 = vmatpush1.msra.mxu0 0.0
  %2211 = vmatprep.subr.mxu0 0.0
  %2212 = vmatpush1.msra.mxu0 0.0
  %2213 = vmatprep.subr.mxu0 0.0
  %2214 = vmatpush1.msra.mxu0 0.0
  %2215 = vmatprep.subr.mxu0 0.0
  %2216 = vmatpush1.msra.mxu0 0.0
  %2217 = vmatprep.subr.mxu0 0.0
  %2218 = vmatpush1.msra.mxu0 0.0
  %2219 = vmatprep.subr.mxu0 0.0
  %2220 = vmatpush1.msra.mxu0 0.0
  %2221 = vmatprep.mubr.f32.mxu0 0.0
  %2222 = vmatmul.mubr.f32.gmra.mrb[0].mxu0 %v2155
  %v2223 = vpop.f32.mrb[0].mxu0
  %v2224 = vadd.f32 0.0, %v2223
  %v2225 = vpop.f32.mrb[0].mxu0
  %2226 = vdwg.mxu0
  %v2227 = vld [vmem:[%s13] sm:$0xff]
  %v2228 = vld [vmem:[%s13 + $0x8] sm:$0xff]
  %v2229 = vld [vmem:[%s13 + $0x10] sm:$0xff]
  %v2230 = vld [vmem:[%s13 + $0x18] sm:$0xff]
  %v2231 = vld [vmem:[%s14] sm:$0x1]
  %v2233 = vlaneseq
  %v2234 = vshrl.u32 %v2233, 7
  %v2235 = vsub.s32 0, %v2234
  %v2236 = vrot.slane %v2231, %v2235
  %v2239 = vsel %vm177, %v2224, 0
  %2241 = vmatprep.subr.mxu0 0.0
  %2242 = vmatpush1.msra.mxu0 %v2227
  %2243 = vmatprep.subr.mxu0 0.0
  %2244 = vmatpush1.msra.mxu0 %v2228
  %2245 = vmatprep.subr.mxu0 0.0
  %2246 = vmatpush1.msra.mxu0 %v2229
  %2247 = vmatprep.subr.mxu0 0.0
  %2248 = vmatpush1.msra.mxu0 %v2230
  %2249 = vmatprep.subr.mxu0 0.0
  %2250 = vmatpush1.msra.mxu0 0.0
  %2251 = vmatprep.subr.mxu0 0.0
  %2252 = vmatpush1.msra.mxu0 0.0
  %2253 = vmatprep.subr.mxu0 0.0
  %2254 = vmatpush1.msra.mxu0 0.0
  %2255 = vmatprep.subr.mxu0 0.0
  %2256 = vmatpush1.msra.mxu0 0.0
  %2257 = vmatprep.subr.mxu0 0.0
  %2258 = vmatpush1.msra.mxu0 0.0
  %2259 = vmatprep.subr.mxu0 0.0
  %2260 = vmatpush1.msra.mxu0 0.0
  %2261 = vmatprep.subr.mxu0 0.0
  %2262 = vmatpush1.msra.mxu0 0.0
  %2263 = vmatprep.subr.mxu0 0.0
  %2264 = vmatpush1.msra.mxu0 0.0
  %2265 = vmatprep.subr.mxu0 0.0
  %2266 = vmatpush1.msra.mxu0 0.0
  %2267 = vmatprep.subr.mxu0 0.0
  %2268 = vmatpush1.msra.mxu0 0.0
  %2269 = vmatprep.subr.mxu0 0.0
  %2270 = vmatpush1.msra.mxu0 0.0
  %2271 = vmatprep.subr.mxu0 0.0
  %2272 = vmatpush1.msra.mxu0 0.0
  %2273 = vmatprep.subr.mxu0 0.0
  %2274 = vmatpush1.msra.mxu0 0.0
  %2275 = vmatprep.subr.mxu0 0.0
  %2276 = vmatpush1.msra.mxu0 0.0
  %2277 = vmatprep.subr.mxu0 0.0
  %2278 = vmatpush1.msra.mxu0 0.0
  %2279 = vmatprep.subr.mxu0 0.0
  %2280 = vmatpush1.msra.mxu0 0.0
  %2281 = vmatprep.subr.mxu0 0.0
  %2282 = vmatpush1.msra.mxu0 0.0
  %2283 = vmatprep.subr.mxu0 0.0
  %2284 = vmatpush1.msra.mxu0 0.0
  %2285 = vmatprep.subr.mxu0 0.0
  %2286 = vmatpush1.msra.mxu0 0.0
  %2287 = vmatprep.subr.mxu0 0.0
  %2288 = vmatpush1.msra.mxu0 0.0
  %2289 = vmatprep.subr.mxu0 0.0
  %2290 = vmatpush1.msra.mxu0 0.0
  %2291 = vmatprep.subr.mxu0 0.0
  %2292 = vmatpush1.msra.mxu0 0.0
  %2293 = vmatprep.subr.mxu0 0.0
  %2294 = vmatpush1.msra.mxu0 0.0
  %2295 = vmatprep.subr.mxu0 0.0
  %2296 = vmatpush1.msra.mxu0 0.0
  %2297 = vmatprep.subr.mxu0 0.0
  %2298 = vmatpush1.msra.mxu0 0.0
  %2299 = vmatprep.subr.mxu0 0.0
  %2300 = vmatpush1.msra.mxu0 0.0
  %2301 = vmatprep.subr.mxu0 0.0
  %2302 = vmatpush1.msra.mxu0 0.0
  %2303 = vmatprep.subr.mxu0 0.0
  %2304 = vmatpush1.msra.mxu0 0.0
  %2305 = vmatprep.mubr.f32.mxu0 0.0
  %2306 = vmatmul.mubr.f32.gmra.mrb[0].mxu0 %v2239
  %v2307 = vpop.f32.mrb[0].mxu0
  %v2308 = vadd.f32 %v2236, %v2307
  %v2309 = vpop.f32.mrb[0].mxu0
  %2310 = vdwg.mxu0
  %v2311 = vtanh.pop %v2308
  %v2312 = vld [vmem:[%s15] sm:$0xff]
  %v2313 = vld [vmem:[%s15 + $0x8] sm:$0xff]
  %v2314 = vld [vmem:[%s15 + $0x10] sm:$0xff]
  %v2315 = vld [vmem:[%s15 + $0x18] sm:$0xff]
  %v2316 = vld [vmem:[%s16] sm:$0x1]
  %v2318 = vlaneseq
  %v2319 = vshrl.u32 %v2318, 7
  %v2320 = vsub.s32 0, %v2319
  %v2321 = vrot.slane %v2316, %v2320
  %v2324 = vsel %vm177, %v2311, 0
  %2326 = vmatprep.subr.mxu0 0.0
  %2327 = vmatpush1.msra.mxu0 %v2312
  %2328 = vmatprep.subr.mxu0 0.0
  %2329 = vmatpush1.msra.mxu0 %v2313
  %2330 = vmatprep.subr.mxu0 0.0
  %2331 = vmatpush1.msra.mxu0 %v2314
  %2332 = vmatprep.subr.mxu0 0.0
  %2333 = vmatpush1.msra.mxu0 %v2315
  %2334 = vmatprep.subr.mxu0 0.0
  %2335 = vmatpush1.msra.mxu0 0.0
  %2336 = vmatprep.subr.mxu0 0.0
  %2337 = vmatpush1.msra.mxu0 0.0
  %2338 = vmatprep.subr.mxu0 0.0
  %2339 = vmatpush1.msra.mxu0 0.0
  %2340 = vmatprep.subr.mxu0 0.0
  %2341 = vmatpush1.msra.mxu0 0.0
  %2342 = vmatprep.subr.mxu0 0.0
  %2343 = vmatpush1.msra.mxu0 0.0
  %2344 = vmatprep.subr.mxu0 0.0
  %2345 = vmatpush1.msra.mxu0 0.0
  %2346 = vmatprep.subr.mxu0 0.0
  %2347 = vmatpush1.msra.mxu0 0.0
  %2348 = vmatprep.subr.mxu0 0.0
  %2349 = vmatpush1.msra.mxu0 0.0
  %2350 = vmatprep.subr.mxu0 0.0
  %2351 = vmatpush1.msra.mxu0 0.0
  %2352 = vmatprep.subr.mxu0 0.0
  %2353 = vmatpush1.msra.mxu0 0.0
  %2354 = vmatprep.subr.mxu0 0.0
  %2355 = vmatpush1.msra.mxu0 0.0
  %2356 = vmatprep.subr.mxu0 0.0
  %2357 = vmatpush1.msra.mxu0 0.0
  %2358 = vmatprep.subr.mxu0 0.0
  %2359 = vmatpush1.msra.mxu0 0.0
  %2360 = vmatprep.subr.mxu0 0.0
  %2361 = vmatpush1.msra.mxu0 0.0
  %2362 = vmatprep.subr.mxu0 0.0
  %2363 = vmatpush1.msra.mxu0 0.0
  %2364 = vmatprep.subr.mxu0 0.0
  %2365 = vmatpush1.msra.mxu0 0.0
  %2366 = vmatprep.subr.mxu0 0.0
  %2367 = vmatpush1.msra.mxu0 0.0
  %2368 = vmatprep.subr.mxu0 0.0
  %2369 = vmatpush1.msra.mxu0 0.0
  %2370 = vmatprep.subr.mxu0 0.0
  %2371 = vmatpush1.msra.mxu0 0.0
  %2372 = vmatprep.subr.mxu0 0.0
  %2373 = vmatpush1.msra.mxu0 0.0
  %2374 = vmatprep.subr.mxu0 0.0
  %2375 = vmatpush1.msra.mxu0 0.0
  %2376 = vmatprep.subr.mxu0 0.0
  %2377 = vmatpush1.msra.mxu0 0.0
  %2378 = vmatprep.subr.mxu0 0.0
  %2379 = vmatpush1.msra.mxu0 0.0
  %2380 = vmatprep.subr.mxu0 0.0
  %2381 = vmatpush1.msra.mxu0 0.0
  %2382 = vmatprep.subr.mxu0 0.0
  %2383 = vmatpush1.msra.mxu0 0.0
  %2384 = vmatprep.subr.mxu0 0.0
  %2385 = vmatpush1.msra.mxu0 0.0
  %2386 = vmatprep.subr.mxu0 0.0
  %2387 = vmatpush1.msra.mxu0 0.0
  %2388 = vmatprep.subr.mxu0 0.0
  %2389 = vmatpush1.msra.mxu0 0.0
  %2390 = vmatprep.mubr.f32.mxu0 0.0
  %2391 = vmatmul.mubr.f32.gmra.mrb[0].mxu0 %v2324
  %v2392 = vpop.f32.mrb[0].mxu0
  %v2393 = vadd.f32 %v2321, %v2392
  %v2394 = vpop.f32.mrb[0].mxu0
  %2395 = vdwg.mxu0
  %v2396 = vsub.f32 0.0, %v2393
  %v2397 = vmul.f32 %v2396, 1.442695
  %v2398 = vpow.pop %v2397
  %v2399 = vadd.f32 %v2398, 1.0
  %v2400 = vrcp.pop %v2399
  %v2401 = vmul.f32 1.0, %v2400
  %2402 = vst [vmem:[%s17] sm:$0x3] %v2401
  // Predicated region
  $region70: #{riskbert_forward.1} parent=0 // pred_check
    _
  $region71: #{riskbert_forward.1} parent=0 // pred_check_branch
    %2404 = sbr.rel (0) target = $region73
  $region72: #{riskbert_forward.1} parent=0 // pred_region
    _
  $region73: #{riskbert_forward.1} parent=0 // pred_fallthru
    _
  // Predicated region
  $region74: #{riskbert_forward.1} parent=0 // pred_check
    _
  $region75: #{riskbert_forward.1} parent=0 // pred_check_branch
    %2406 = sbr.rel (0) target = $region77
  $region76: #{riskbert_forward.1} parent=0 // pred_region
    _
  $region77: #{riskbert_forward.1} parent=0 // pred_fallthru
    _

</llo_original>
